<compile_context>
chip_gen: v7x
topology: tpu7x:2x2x1
jax: 0.10.0
libtpu: 0.0.40
codegen_flags: <defaults>
</compile_context>

<pallas_src>
import jax
import jax.numpy as jnp
from jax.experimental import pallas as pl
from jax.experimental.pallas import tpu as pltpu

LANES = 128


# ----------------------------- Pallas kernels -----------------------------

def _conv_tanh_pool_kernel(p_ref, w_ref, b_ref, o_ref):
    """Fused conv(as matmul) + bias + tanh + 2x2 avg-pool.

    p_ref: (4, tile_m, K) - quarter q holds, for every pooled output row, the
           im2col patch of the conv-output pixel at pool-window corner q.
    w_ref: (K, 128), b_ref: (1, 128), o_ref: (tile_m, 128)  (lane-dense).
    """
    w = w_ref[...]
    b = b_ref[...]
    y0 = jnp.tanh(jnp.dot(p_ref[0], w, preferred_element_type=jnp.float32) + b)
    y1 = jnp.tanh(jnp.dot(p_ref[1], w, preferred_element_type=jnp.float32) + b)
    y2 = jnp.tanh(jnp.dot(p_ref[2], w, preferred_element_type=jnp.float32) + b)
    y3 = jnp.tanh(jnp.dot(p_ref[3], w, preferred_element_type=jnp.float32) + b)
    o_ref[...] = 0.25 * (y0 + y1 + y2 + y3)


def _fc_kernel(x_ref, w1_ref, b1_ref, w2_ref, b2_ref, o_ref):
    # out = (tanh(x @ W1 + b1)) @ W2 + b2
    h = jnp.tanh(
        jnp.dot(x_ref[...], w1_ref[...], preferred_element_type=jnp.float32)
        + b1_ref[...]
    )
    o_ref[...] = (
        jnp.dot(h, w2_ref[...], preferred_element_type=jnp.float32) + b2_ref[...]
    )


# ------------------------------ helpers (glue) ------------------------------

def _round_up(x, m):
    return ((x + m - 1) // m) * m


def prepare_params(params):
    """One-time weight preprocessing (hoisted out of the forward pass)."""
    c1w, c1b, c2w, c2b, f1w, f1b, f2w, f2b = params

    def pad_cols(m, n=LANES):
        return jnp.pad(m.astype(jnp.float32), ((0, 0), (0, n - m.shape[1])))

    # Conv weights: (Cout, Cin, 5, 5) -> (Cin*25, Cout) padded to 128 lanes.
    w1p = pad_cols(c1w.reshape(c1w.shape[0], -1).T)          # (25, 128)
    b1p = pad_cols(c1b.reshape(1, -1))                       # (1, 128)
    w2p = pad_cols(c2w.reshape(c2w.shape[0], -1).T)          # (150, 128)
    b2p = pad_cols(c2b.reshape(1, -1))                       # (1, 128)

    # fc1: rows permuted so the NHWC (ph, pw, c) flatten produced by the conv2
    # kernel matches PyTorch's NCHW x.view(B, -1) @ f1w.T exactly.
    n_sp, n_ch = 16, 16                                      # 4*4 spatial, 16 channels
    kprime = jnp.arange(f1w.shape[1])
    perm = (kprime % n_ch) * n_sp + kprime // n_ch           # NHWC idx -> NCHW src idx
    f1p = pad_cols(f1w.T[perm])                              # (256, 128)
    fb1 = pad_cols(f1b.reshape(1, -1))                       # (1, 128)
    f2p = f2w.T.astype(jnp.float32)                          # (120, 84)
    f2p = jnp.pad(f2p, ((0, LANES - f2p.shape[0]), (0, LANES - f2p.shape[1])))
    fb2 = pad_cols(f2b.reshape(1, -1))                       # (1, 128)
    return (w1p, b1p, w2p, b2p, f1p, fb1, f2p, fb2)


def _im2col_pool_quarters(x, k):
    """x: (B, H, W, C) NHWC -> (patches, Hp, Wp).

    patches: (4, B*Hp*Wp, C*k*k).  Quarter q = 2*wh + ww holds, for each pooled
    output position (b, ph, pw), the im2col patch of conv-output pixel
    (2*ph + wh, 2*pw + ww), with K ordered (cin, kh, kw) to match PyTorch weights.
    """
    B, H, W, C = x.shape
    Ho, Wo = H - k + 1, W - k + 1
    Hp, Wp = Ho // 2, Wo // 2
    taps = [x[:, kh:kh + Ho, kw:kw + Wo, :] for kh in range(k) for kw in range(k)]
    p = jnp.stack(taps, axis=-1)                    # (B, Ho, Wo, C, k*k)
    p = p.reshape(B, Ho, Wo, C * k * k)             # K index = cin*k*k + kh*k + kw
    p = p.reshape(B, Hp, 2, Wp, 2, C * k * k)
    p = p.transpose(2, 4, 0, 1, 3, 5)               # (2, 2, B, Hp, Wp, K)
    return p.reshape(4, B * Hp * Wp, C * k * k), Hp, Wp


def _conv_tanh_pool(quarters, w_pad, b_pad, max_tile=512):
    """quarters: (4, Mq, K) f32 -> pooled activations (Mq, 128) f32."""
    _, Mq, K = quarters.shape
    Np = w_pad.shape[1]
    tile = min(max_tile, _round_up(Mq, 8))
    Mqp = _round_up(Mq, tile)
    if Mqp != Mq:
        quarters = jnp.pad(quarters, ((0, 0), (0, Mqp - Mq), (0, 0)))
    out = pl.pallas_call(
        _conv_tanh_pool_kernel,
        out_shape=jax.ShapeDtypeStruct((Mqp, Np), jnp.float32),
        grid_spec=pltpu.PrefetchScalarGridSpec(
            num_scalar_prefetch=0,
            grid=(Mqp // tile,),
            in_specs=[
                pl.BlockSpec((4, tile, K), lambda i: (0, i, 0)),
                pl.BlockSpec((K, Np), lambda i: (0, 0)),
                pl.BlockSpec((1, Np), lambda i: (0, 0)),
            ],
            out_specs=pl.BlockSpec((tile, Np), lambda i: (i, 0)),
        ),
        compiler_params=pltpu.CompilerParams(dimension_semantics=("parallel",)),
    )(quarters, w_pad, b_pad)
    return out[:Mq]


def _fc(flat, f1p, fb1, f2p, fb2, max_tile=512):
    """flat: (B, 256) NHWC-flattened features -> (B, 84)."""
    B, K1 = flat.shape
    tile = min(max_tile, _round_up(B, 8))
    Bp = _round_up(B, tile)
    if Bp != B:
        flat = jnp.pad(flat, ((0, Bp - B), (0, 0)))
    out = pl.pallas_call(
        _fc_kernel,
        out_shape=jax.ShapeDtypeStruct((Bp, LANES), jnp.float32),
        grid_spec=pltpu.PrefetchScalarGridSpec(
            num_scalar_prefetch=0,
            grid=(Bp // tile,),
            in_specs=[
                pl.BlockSpec((tile, K1), lambda i: (i, 0)),
                pl.BlockSpec((K1, LANES), lambda i: (0, 0)),
                pl.BlockSpec((1, LANES), lambda i: (0, 0)),
                pl.BlockSpec((LANES, LANES), lambda i: (0, 0)),
                pl.BlockSpec((1, LANES), lambda i: (0, 0)),
            ],
            out_specs=pl.BlockSpec((tile, LANES), lambda i: (i, 0)),
        ),
        compiler_params=pltpu.CompilerParams(dimension_semantics=("parallel",)),
    )(flat, f1p, fb1, f2p, fb2)
    return out[:B, :84]


# ------------------------------ LeNet forward ------------------------------

def lenet_forward(x, prepped):
    """x: (B, 1, 28, 28) NCHW float32 -> (B, 84)."""
    (w1p, b1p, w2p, b2p, f1p, fb1, f2p, fb2) = prepped
    B = x.shape[0]
    xh = jnp.transpose(x, (0, 2, 3, 1))                 # NCHW -> NHWC (Cin=1)

    # conv1 (1->6, k=5) + tanh + avgpool2  (one fused kernel)
    q1, Hp1, Wp1 = _im2col_pool_quarters(xh, 5)         # (4, B*144, 25)
    y1 = _conv_tanh_pool(q1, w1p, b1p)                  # (B*144, 128)
    y1 = y1[:, :6].reshape(B, Hp1, Wp1, 6)              # (B, 12, 12, 6) NHWC

    # conv2 (6->16, k=5) + tanh + avgpool2  (one fused kernel)
    q2, Hp2, Wp2 = _im2col_pool_quarters(y1, 5)         # (4, B*16, 150)
    y2 = _conv_tanh_pool(q2, w2p, b2p)                  # (B*16, 128)

    # NHWC flatten (no transpose needed: f1p rows were permuted at prep time
    # to match PyTorch's NCHW view ordering) + fused FC stack.
    flat = y2[:, :16].reshape(B, Hp2 * Wp2 * 16)        # (B, 256)
    return _fc(flat, f1p, fb1, f2p, fb2)                # (B, 84)


# --------------------------- pure-JAX reference ---------------------------

def _ref_forward(x, params):
    (c1w, c1b, c2w, c2b, f1w, f1b, f2w, f2b) = params

    def conv(x, w, b):
        y = jax.lax.conv_general_dilated(
            x, w, (1, 1), "VALID", dimension_numbers=("NCHW", "OIHW", "NCHW")
        )
        return y + b.reshape(1, -1, 1, 1)

    def pool(x):
        B, C, H, W = x.shape
        return x.reshape(B, C, H // 2, 2, W // 2, 2).mean(axis=(3, 5))

    y = pool(jnp.tanh(conv(x, c1w, c1b)))
    y = pool(jnp.tanh(conv(y, c2w, c2b)))
    flat = y.reshape(y.shape[0], -1)
    h = jnp.tanh(flat @ f1w.T + f1b)
    return h @ f2w.T + f2b


# ---------------------------------- main ----------------------------------

if __name__ == "__main__":
    key = jax.random.PRNGKey(0)
    ks = jax.random.split(key, 9)

    # Deterministic synthetic parameters (PyTorch shapes, flag=False config).
    params = (
        0.1 * jax.random.normal(ks[0], (6, 1, 5, 5), jnp.float32),    # conv1 w
        0.1 * jax.random.normal(ks[1], (6,), jnp.float32),            # conv1 b
        0.1 * jax.random.normal(ks[2], (16, 6, 5, 5), jnp.float32),   # conv2 w
        0.1 * jax.random.normal(ks[3], (16,), jnp.float32),           # conv2 b
        0.1 * jax.random.normal(ks[4], (120, 256), jnp.float32),      # fc1 w
        0.1 * jax.random.normal(ks[5], (120,), jnp.float32),          # fc1 b
        0.1 * jax.random.normal(ks[6], (84, 120), jnp.float32),       # fc2 w
        0.1 * jax.random.normal(ks[7], (84,), jnp.float32),           # fc2 b
    )

    # Input: batch=2, 1x28x28 (so the flattened features equal 256).
    x = jax.random.normal(ks[8], (2, 1, 28, 28), jnp.float32)

    prepped = prepare_params(params)          # one-time weight preprocessing
    fwd = jax.jit(lenet_forward)

    out = jax.block_until_ready(fwd(x, prepped))
    ref = jax.block_until_ready(_ref_forward(x, params))

    assert out.shape == (2, 84), out.shape
    assert jnp.allclose(out, ref, atol=1e-2, rtol=1e-2), (
        float(jnp.max(jnp.abs(out - ref)))
    )
    print("KERNEL_OK")
</pallas_src>

<mosaic_0001>
module attributes {stable_mosaic.version = 11 : i64} {
  func.func @_conv_tanh_pool_kernel(%arg0: i32, %arg1: memref<4x288x25xf32, #tpu.memory_space<vmem>>, %arg2: memref<25x128xf32, #tpu.memory_space<vmem>>, %arg3: memref<1x128xf32, #tpu.memory_space<vmem>>, %arg4: memref<288x128xf32, #tpu.memory_space<vmem>>) attributes {dimension_semantics = [#tpu.dimension_semantics<parallel>], iteration_bounds = array<i64: 1>, scalar_prefetch = 0 : i64, scratch_operands = 0 : i64, tpu.core_type = #tpu.core_type<tc>, window_params = [{transform_indices = @transform_0, window_bounds = array<i64: 4, 288, 25>}, {pipeline_mode = #tpu.pipeline_mode<synchronous>, transform_indices = @transform_1, window_bounds = array<i64: 25, 128>}, {pipeline_mode = #tpu.pipeline_mode<synchronous>, transform_indices = @transform_2, window_bounds = array<i64: 1, 128>}, {transform_indices = @transform_3, window_bounds = array<i64: 288, 128>}]} {
    %c0 = arith.constant 0 : index
    %c0_0 = arith.constant 0 : index
    %0 = vector.load %arg2[%c0, %c0_0] : memref<25x128xf32, #tpu.memory_space<vmem>>, vector<25x128xf32>
    %c0_1 = arith.constant 0 : index
    %c0_2 = arith.constant 0 : index
    %1 = vector.load %arg3[%c0_1, %c0_2] : memref<1x128xf32, #tpu.memory_space<vmem>>, vector<1x128xf32>
    %c0_3 = arith.constant 0 : index
    %c0_4 = arith.constant 0 : index
    %c0_5 = arith.constant 0 : index
    %2 = vector.load %arg1[%c0_3, %c0_4, %c0_5] : memref<4x288x25xf32, #tpu.memory_space<vmem>>, vector<1x288x25xf32>
    %3 = vector.shape_cast %2 : vector<1x288x25xf32> to vector<288x25xf32>
    %cst = arith.constant dense<0.000000e+00> : vector<288x128xf32>
    %4 = tpu.matmul %3, %0, %cst {dimension_numbers = #tpu.dot_dimension_numbers<[1], [0], [0], [1], [0, 0, 1, 1], [], []>} : vector<288x25xf32>, vector<25x128xf32>, vector<288x128xf32> -> vector<288x128xf32>
    %5 = vector.broadcast %1 : vector<1x128xf32> to vector<288x128xf32>
    %6 = arith.addf %4, %5 : vector<288x128xf32>
    %7 = math.tanh %6 : vector<288x128xf32>
    %c1 = arith.constant 1 : index
    %c0_6 = arith.constant 0 : index
    %c0_7 = arith.constant 0 : index
    %8 = vector.load %arg1[%c1, %c0_6, %c0_7] : memref<4x288x25xf32, #tpu.memory_space<vmem>>, vector<1x288x25xf32>
    %9 = vector.shape_cast %8 : vector<1x288x25xf32> to vector<288x25xf32>
    %cst_8 = arith.constant dense<0.000000e+00> : vector<288x128xf32>
    %10 = tpu.matmul %9, %0, %cst_8 {dimension_numbers = #tpu.dot_dimension_numbers<[1], [0], [0], [1], [0, 0, 1, 1], [], []>} : vector<288x25xf32>, vector<25x128xf32>, vector<288x128xf32> -> vector<288x128xf32>
    %11 = vector.broadcast %1 : vector<1x128xf32> to vector<288x128xf32>
    %12 = arith.addf %10, %11 : vector<288x128xf32>
    %13 = math.tanh %12 : vector<288x128xf32>
    %c2 = arith.constant 2 : index
    %c0_9 = arith.constant 0 : index
    %c0_10 = arith.constant 0 : index
    %14 = vector.load %arg1[%c2, %c0_9, %c0_10] : memref<4x288x25xf32, #tpu.memory_space<vmem>>, vector<1x288x25xf32>
    %15 = vector.shape_cast %14 : vector<1x288x25xf32> to vector<288x25xf32>
    %cst_11 = arith.constant dense<0.000000e+00> : vector<288x128xf32>
    %16 = tpu.matmul %15, %0, %cst_11 {dimension_numbers = #tpu.dot_dimension_numbers<[1], [0], [0], [1], [0, 0, 1, 1], [], []>} : vector<288x25xf32>, vector<25x128xf32>, vector<288x128xf32> -> vector<288x128xf32>
    %17 = vector.broadcast %1 : vector<1x128xf32> to vector<288x128xf32>
    %18 = arith.addf %16, %17 : vector<288x128xf32>
    %19 = math.tanh %18 : vector<288x128xf32>
    %c3 = arith.constant 3 : index
    %c0_12 = arith.constant 0 : index
    %c0_13 = arith.constant 0 : index
    %20 = vector.load %arg1[%c3, %c0_12, %c0_13] : memref<4x288x25xf32, #tpu.memory_space<vmem>>, vector<1x288x25xf32>
    %21 = vector.shape_cast %20 : vector<1x288x25xf32> to vector<288x25xf32>
    %cst_14 = arith.constant dense<0.000000e+00> : vector<288x128xf32>
    %22 = tpu.matmul %21, %0, %cst_14 {dimension_numbers = #tpu.dot_dimension_numbers<[1], [0], [0], [1], [0, 0, 1, 1], [], []>} : vector<288x25xf32>, vector<25x128xf32>, vector<288x128xf32> -> vector<288x128xf32>
    %23 = vector.broadcast %1 : vector<1x128xf32> to vector<288x128xf32>
    %24 = arith.addf %22, %23 : vector<288x128xf32>
    %25 = math.tanh %24 : vector<288x128xf32>
    %26 = arith.addf %7, %13 : vector<288x128xf32>
    %27 = arith.addf %26, %19 : vector<288x128xf32>
    %28 = arith.addf %27, %25 : vector<288x128xf32>
    %cst_15 = arith.constant 2.500000e-01 : f32
    %29 = vector.broadcast %cst_15 : f32 to vector<288x128xf32>
    %30 = arith.mulf %29, %28 : vector<288x128xf32>
    %c0_16 = arith.constant 0 : index
    %c0_17 = arith.constant 0 : index
    %31 = vector.load %arg4[%c0_16, %c0_17] : memref<288x128xf32, #tpu.memory_space<vmem>>, vector<288x128xf32>
    tpu.vector_store %arg4[%c0_16, %c0_17], %30 {strides = array<i32>} : memref<288x128xf32, #tpu.memory_space<vmem>>, vector<288x128xf32>,
    return
  }
  func.func @transform_0(%arg0: i32) -> (i32, i32, i32) {
    %c0_i32 = arith.constant 0 : i32
    %c0_i32_0 = arith.constant 0 : i32
    %c0_i32_1 = arith.constant 0 : i32
    return %c0_i32, %arg0, %c0_i32_0 : i32, i32, i32
  }
  func.func @transform_1(%arg0: i32) -> (i32, i32) {
    %c0_i32 = arith.constant 0 : i32
    %c0_i32_0 = arith.constant 0 : i32
    %c0_i32_1 = arith.constant 0 : i32
    return %c0_i32, %c0_i32_0 : i32, i32
  }
  func.func @transform_2(%arg0: i32) -> (i32, i32) {
    %c0_i32 = arith.constant 0 : i32
    %c0_i32_0 = arith.constant 0 : i32
    %c0_i32_1 = arith.constant 0 : i32
    return %c0_i32, %c0_i32_0 : i32, i32
  }
  func.func @transform_3(%arg0: i32) -> (i32, i32) {
    %c0_i32 = arith.constant 0 : i32
    %c0_i32_0 = arith.constant 0 : i32
    return %arg0, %c0_i32 : i32, i32
  }
}

module attributes {stable_mosaic.version = 11 : i64} {
  func.func @_conv_tanh_pool_kernel(%arg0: i32, %arg1: memref<4x32x150xf32, #tpu.memory_space<vmem>>, %arg2: memref<150x128xf32, #tpu.memory_space<vmem>>, %arg3: memref<1x128xf32, #tpu.memory_space<vmem>>, %arg4: memref<32x128xf32, #tpu.memory_space<vmem>>) attributes {dimension_semantics = [#tpu.dimension_semantics<parallel>], iteration_bounds = array<i64: 1>, scalar_prefetch = 0 : i64, scratch_operands = 0 : i64, tpu.core_type = #tpu.core_type<tc>, window_params = [{transform_indices = @transform_0, window_bounds = array<i64: 4, 32, 150>}, {pipeline_mode = #tpu.pipeline_mode<synchronous>, transform_indices = @transform_1, window_bounds = array<i64: 150, 128>}, {pipeline_mode = #tpu.pipeline_mode<synchronous>, transform_indices = @transform_2, window_bounds = array<i64: 1, 128>}, {transform_indices = @transform_3, window_bounds = array<i64: 32, 128>}]} {
    %c0 = arith.constant 0 : index
    %c0_0 = arith.constant 0 : index
    %0 = vector.load %arg2[%c0, %c0_0] : memref<150x128xf32, #tpu.memory_space<vmem>>, vector<150x128xf32>
    %c0_1 = arith.constant 0 : index
    %c0_2 = arith.constant 0 : index
    %1 = vector.load %arg3[%c0_1, %c0_2] : memref<1x128xf32, #tpu.memory_space<vmem>>, vector<1x128xf32>
    %c0_3 = arith.constant 0 : index
    %c0_4 = arith.constant 0 : index
    %c0_5 = arith.constant 0 : index
    %2 = vector.load %arg1[%c0_3, %c0_4, %c0_5] : memref<4x32x150xf32, #tpu.memory_space<vmem>>, vector<1x32x150xf32>
    %3 = vector.shape_cast %2 : vector<1x32x150xf32> to vector<32x150xf32>
    %cst = arith.constant dense<0.000000e+00> : vector<32x128xf32>
    %4 = tpu.matmul %3, %0, %cst {dimension_numbers = #tpu.dot_dimension_numbers<[1], [0], [0], [1], [0, 0, 1, 1], [], []>} : vector<32x150xf32>, vector<150x128xf32>, vector<32x128xf32> -> vector<32x128xf32>
    %5 = vector.broadcast %1 : vector<1x128xf32> to vector<32x128xf32>
    %6 = arith.addf %4, %5 : vector<32x128xf32>
    %7 = math.tanh %6 : vector<32x128xf32>
    %c1 = arith.constant 1 : index
    %c0_6 = arith.constant 0 : index
    %c0_7 = arith.constant 0 : index
    %8 = vector.load %arg1[%c1, %c0_6, %c0_7] : memref<4x32x150xf32, #tpu.memory_space<vmem>>, vector<1x32x150xf32>
    %9 = vector.shape_cast %8 : vector<1x32x150xf32> to vector<32x150xf32>
    %cst_8 = arith.constant dense<0.000000e+00> : vector<32x128xf32>
    %10 = tpu.matmul %9, %0, %cst_8 {dimension_numbers = #tpu.dot_dimension_numbers<[1], [0], [0], [1], [0, 0, 1, 1], [], []>} : vector<32x150xf32>, vector<150x128xf32>, vector<32x128xf32> -> vector<32x128xf32>
    %11 = vector.broadcast %1 : vector<1x128xf32> to vector<32x128xf32>
    %12 = arith.addf %10, %11 : vector<32x128xf32>
    %13 = math.tanh %12 : vector<32x128xf32>
    %c2 = arith.constant 2 : index
    %c0_9 = arith.constant 0 : index
    %c0_10 = arith.constant 0 : index
    %14 = vector.load %arg1[%c2, %c0_9, %c0_10] : memref<4x32x150xf32, #tpu.memory_space<vmem>>, vector<1x32x150xf32>
    %15 = vector.shape_cast %14 : vector<1x32x150xf32> to vector<32x150xf32>
    %cst_11 = arith.constant dense<0.000000e+00> : vector<32x128xf32>
    %16 = tpu.matmul %15, %0, %cst_11 {dimension_numbers = #tpu.dot_dimension_numbers<[1], [0], [0], [1], [0, 0, 1, 1], [], []>} : vector<32x150xf32>, vector<150x128xf32>, vector<32x128xf32> -> vector<32x128xf32>
    %17 = vector.broadcast %1 : vector<1x128xf32> to vector<32x128xf32>
    %18 = arith.addf %16, %17 : vector<32x128xf32>
    %19 = math.tanh %18 : vector<32x128xf32>
    %c3 = arith.constant 3 : index
    %c0_12 = arith.constant 0 : index
    %c0_13 = arith.constant 0 : index
    %20 = vector.load %arg1[%c3, %c0_12, %c0_13] : memref<4x32x150xf32, #tpu.memory_space<vmem>>, vector<1x32x150xf32>
    %21 = vector.shape_cast %20 : vector<1x32x150xf32> to vector<32x150xf32>
    %cst_14 = arith.constant dense<0.000000e+00> : vector<32x128xf32>
    %22 = tpu.matmul %21, %0, %cst_14 {dimension_numbers = #tpu.dot_dimension_numbers<[1], [0], [0], [1], [0, 0, 1, 1], [], []>} : vector<32x150xf32>, vector<150x128xf32>, vector<32x128xf32> -> vector<32x128xf32>
    %23 = vector.broadcast %1 : vector<1x128xf32> to vector<32x128xf32>
    %24 = arith.addf %22, %23 : vector<32x128xf32>
    %25 = math.tanh %24 : vector<32x128xf32>
    %26 = arith.addf %7, %13 : vector<32x128xf32>
    %27 = arith.addf %26, %19 : vector<32x128xf32>
    %28 = arith.addf %27, %25 : vector<32x128xf32>
    %cst_15 = arith.constant 2.500000e-01 : f32
    %29 = vector.broadcast %cst_15 : f32 to vector<32x128xf32>
    %30 = arith.mulf %29, %28 : vector<32x128xf32>
    %c0_16 = arith.constant 0 : index
    %c0_17 = arith.constant 0 : index
    %31 = vector.load %arg4[%c0_16, %c0_17] : memref<32x128xf32, #tpu.memory_space<vmem>>, vector<32x128xf32>
    tpu.vector_store %arg4[%c0_16, %c0_17], %30 {strides = array<i32>} : memref<32x128xf32, #tpu.memory_space<vmem>>, vector<32x128xf32>,
    return
  }
  func.func @transform_0(%arg0: i32) -> (i32, i32, i32) {
    %c0_i32 = arith.constant 0 : i32
    %c0_i32_0 = arith.constant 0 : i32
    %c0_i32_1 = arith.constant 0 : i32
    return %c0_i32, %arg0, %c0_i32_0 : i32, i32, i32
  }
  func.func @transform_1(%arg0: i32) -> (i32, i32) {
    %c0_i32 = arith.constant 0 : i32
    %c0_i32_0 = arith.constant 0 : i32
    %c0_i32_1 = arith.constant 0 : i32
    return %c0_i32, %c0_i32_0 : i32, i32
  }
  func.func @transform_2(%arg0: i32) -> (i32, i32) {
    %c0_i32 = arith.constant 0 : i32
    %c0_i32_0 = arith.constant 0 : i32
    %c0_i32_1 = arith.constant 0 : i32
    return %c0_i32, %c0_i32_0 : i32, i32
  }
  func.func @transform_3(%arg0: i32) -> (i32, i32) {
    %c0_i32 = arith.constant 0 : i32
    %c0_i32_0 = arith.constant 0 : i32
    return %arg0, %c0_i32 : i32, i32
  }
}

module attributes {stable_mosaic.version = 11 : i64} {
  func.func @_fc_kernel(%arg0: i32, %arg1: memref<8x256xf32, #tpu.memory_space<vmem>>, %arg2: memref<256x128xf32, #tpu.memory_space<vmem>>, %arg3: memref<1x128xf32, #tpu.memory_space<vmem>>, %arg4: memref<128x128xf32, #tpu.memory_space<vmem>>, %arg5: memref<1x128xf32, #tpu.memory_space<vmem>>, %arg6: memref<8x128xf32, #tpu.memory_space<vmem>>) attributes {dimension_semantics = [#tpu.dimension_semantics<parallel>], iteration_bounds = array<i64: 1>, scalar_prefetch = 0 : i64, scratch_operands = 0 : i64, tpu.core_type = #tpu.core_type<tc>, window_params = [{transform_indices = @transform_0, window_bounds = array<i64: 8, 256>}, {pipeline_mode = #tpu.pipeline_mode<synchronous>, transform_indices = @transform_1, window_bounds = array<i64: 256, 128>}, {pipeline_mode = #tpu.pipeline_mode<synchronous>, transform_indices = @transform_2, window_bounds = array<i64: 1, 128>}, {pipeline_mode = #tpu.pipeline_mode<synchronous>, transform_indices = @transform_3, window_bounds = array<i64: 128, 128>}, {pipeline_mode = #tpu.pipeline_mode<synchronous>, transform_indices = @transform_4, window_bounds = array<i64: 1, 128>}, {transform_indices = @transform_5, window_bounds = array<i64: 8, 128>}]} {
    %c0 = arith.constant 0 : index
    %c0_0 = arith.constant 0 : index
    %0 = vector.load %arg1[%c0, %c0_0] : memref<8x256xf32, #tpu.memory_space<vmem>>, vector<8x256xf32>
    %c0_1 = arith.constant 0 : index
    %c0_2 = arith.constant 0 : index
    %1 = vector.load %arg2[%c0_1, %c0_2] : memref<256x128xf32, #tpu.memory_space<vmem>>, vector<256x128xf32>
    %cst = arith.constant dense<0.000000e+00> : vector<8x128xf32>
    %2 = tpu.matmul %0, %1, %cst {dimension_numbers = #tpu.dot_dimension_numbers<[1], [0], [0], [1], [0, 0, 1, 1], [], []>} : vector<8x256xf32>, vector<256x128xf32>, vector<8x128xf32> -> vector<8x128xf32>
    %c0_3 = arith.constant 0 : index
    %c0_4 = arith.constant 0 : index
    %3 = vector.load %arg3[%c0_3, %c0_4] : memref<1x128xf32, #tpu.memory_space<vmem>>, vector<1x128xf32>
    %4 = vector.broadcast %3 : vector<1x128xf32> to vector<8x128xf32>
    %5 = arith.addf %2, %4 : vector<8x128xf32>
    %6 = math.tanh %5 : vector<8x128xf32>
    %c0_5 = arith.constant 0 : index
    %c0_6 = arith.constant 0 : index
    %7 = vector.load %arg4[%c0_5, %c0_6] : memref<128x128xf32, #tpu.memory_space<vmem>>, vector<128x128xf32>
    %cst_7 = arith.constant dense<0.000000e+00> : vector<8x128xf32>
    %8 = tpu.matmul %6, %7, %cst_7 {dimension_numbers = #tpu.dot_dimension_numbers<[1], [0], [0], [1], [0, 0, 1, 1], [], []>} : vector<8x128xf32>, vector<128x128xf32>, vector<8x128xf32> -> vector<8x128xf32>
    %c0_8 = arith.constant 0 : index
    %c0_9 = arith.constant 0 : index
    %9 = vector.load %arg5[%c0_8, %c0_9] : memref<1x128xf32, #tpu.memory_space<vmem>>, vector<1x128xf32>
    %10 = vector.broadcast %9 : vector<1x128xf32> to vector<8x128xf32>
    %11 = arith.addf %8, %10 : vector<8x128xf32>
    %c0_10 = arith.constant 0 : index
    %c0_11 = arith.constant 0 : index
    %12 = vector.load %arg6[%c0_10, %c0_11] : memref<8x128xf32, #tpu.memory_space<vmem>>, vector<8x128xf32>
    tpu.vector_store %arg6[%c0_10, %c0_11], %11 {strides = array<i32>} : memref<8x128xf32, #tpu.memory_space<vmem>>, vector<8x128xf32>,
    return
  }
  func.func @transform_0(%arg0: i32) -> (i32, i32) {
    %c0_i32 = arith.constant 0 : i32
    %c0_i32_0 = arith.constant 0 : i32
    return %arg0, %c0_i32 : i32, i32
  }
  func.func @transform_1(%arg0: i32) -> (i32, i32) {
    %c0_i32 = arith.constant 0 : i32
    %c0_i32_0 = arith.constant 0 : i32
    %c0_i32_1 = arith.constant 0 : i32
    return %c0_i32, %c0_i32_0 : i32, i32
  }
  func.func @transform_2(%arg0: i32) -> (i32, i32) {
    %c0_i32 = arith.constant 0 : i32
    %c0_i32_0 = arith.constant 0 : i32
    %c0_i32_1 = arith.constant 0 : i32
    return %c0_i32, %c0_i32_0 : i32, i32
  }
  func.func @transform_3(%arg0: i32) -> (i32, i32) {
    %c0_i32 = arith.constant 0 : i32
    %c0_i32_0 = arith.constant 0 : i32
    %c0_i32_1 = arith.constant 0 : i32
    return %c0_i32, %c0_i32_0 : i32, i32
  }
  func.func @transform_4(%arg0: i32) -> (i32, i32) {
    %c0_i32 = arith.constant 0 : i32
    %c0_i32_0 = arith.constant 0 : i32
    %c0_i32_1 = arith.constant 0 : i32
    return %c0_i32, %c0_i32_0 : i32, i32
  }
  func.func @transform_5(%arg0: i32) -> (i32, i32) {
    %c0_i32 = arith.constant 0 : i32
    %c0_i32_0 = arith.constant 0 : i32
    return %arg0, %c0_i32 : i32, i32
  }
}

</mosaic_0001>

<llo_original>
// kernel: lenet_forward.3
$region0: #{lenet_forward.3}
  #allocation0 [shape = 'u32[]', space=smem, size = 0x4, offset = 0x4, fixed_abs, tag = 'smem constant byte address 0x4 - core index']
  #allocation1 [shape = 'u32[144,128]{1,0:T(1,128)}', space=vmem, size = 0x12000, scoped, tag = 'internal scratch']
  %s0 = inlined_call_operand.vmem [shape: f32[4,288,25], index: 0, kind: input, shape index: {}]
  %s1 = inlined_call_operand.vmem [shape: f32[25,128], index: 1, kind: input, shape index: {}]
  %s2 = inlined_call_operand.vmem [shape: f32[1,128], index: 2, kind: input, shape index: {}]
  %s3 = inlined_call_operand.vmem [shape: f32[288,128], index: 3, kind: output, shape index: {}]
  %s4 = sld [smem:[#allocation0]]
  $region22: #{lenet_forward.3} parent=0
    _
  %s6 = ssub.s32 1, %s4
  %s7 = scalar_select 0, %s6, %s4
  // Predicated region
  $region2: #{lenet_forward.3} parent=0 // pred_check
    _
  $region3: #{lenet_forward.3} parent=0 // pred_check_branch
    %9 = sbr.rel (0) target = $region5
  $region4: #{lenet_forward.3} parent=0 // pred_region
    _
  $region5: #{lenet_forward.3} parent=0 // pred_fallthru
    _
  // Predicated region
  $region6: #{lenet_forward.3} parent=0 // pred_check
    _
  $region7: #{lenet_forward.3} parent=0 // pred_check_branch
    %11 = sbr.rel (0) target = $region9
  $region8: #{lenet_forward.3} parent=0 // pred_region
    _
  $region9: #{lenet_forward.3} parent=0 // pred_fallthru
    _
  // Predicated region
  $region10: #{lenet_forward.3} parent=0 // pred_check
    _
  $region11: #{lenet_forward.3} parent=0 // pred_check_branch
    %13 = sbr.rel (0) target = $region13
  $region12: #{lenet_forward.3} parent=0 // pred_region
    _
  $region13: #{lenet_forward.3} parent=0 // pred_fallthru
    _
  %v14 = vld [vmem:[%s1] sm:$0xff]
  %v15 = vld [vmem:[%s1 + $0x8] sm:$0xff]
  %v16 = vld [vmem:[%s1 + $0x10] sm:$0xff]
  %v17 = vld [vmem:[%s1 + $0x18] sm:$0x1]
  %v18 = vld [vmem:[%s2] sm:$0x1]
  %v19 = vld [vmem:[%s0] sm:$0xff]
  %v20 = vld [vmem:[%s0 + $0x8] sm:$0xff]
  %v21 = vld [vmem:[%s0 + $0x10] sm:$0xff]
  %v22 = vld [vmem:[%s0 + $0x18] sm:$0xff]
  %v23 = vld [vmem:[%s0 + $0x20] sm:$0xff]
  %v24 = vld [vmem:[%s0 + $0x28] sm:$0xff]
  %v25 = vld [vmem:[%s0 + $0x30] sm:$0xff]
  %v26 = vld [vmem:[%s0 + $0x38] sm:$0xff]
  %v27 = vld [vmem:[%s0 + $0x40] sm:$0xff]
  %v28 = vld [vmem:[%s0 + $0x48] sm:$0xff]
  %v29 = vld [vmem:[%s0 + $0x50] sm:$0xff]
  %v30 = vld [vmem:[%s0 + $0x58] sm:$0xff]
  %v31 = vld [vmem:[%s0 + $0x60] sm:$0xff]
  %v32 = vld [vmem:[%s0 + $0x68] sm:$0xff]
  %v33 = vld [vmem:[%s0 + $0x70] sm:$0xff]
  %v34 = vld [vmem:[%s0 + $0x78] sm:$0xff]
  %v35 = vld [vmem:[%s0 + $0x80] sm:$0xff]
  %v36 = vld [vmem:[%s0 + $0x88] sm:$0xff]
  %v37 = vld [vmem:[%s0 + $0x90] sm:$0xff]
  %v38 = vld [vmem:[%s0 + $0x98] sm:$0xff]
  %v39 = vld [vmem:[%s0 + $0xa0] sm:$0xff]
  %v40 = vld [vmem:[%s0 + $0xa8] sm:$0xff]
  %v41 = vld [vmem:[%s0 + $0xb0] sm:$0xff]
  %v42 = vld [vmem:[%s0 + $0xb8] sm:$0xff]
  %v43 = vld [vmem:[%s0 + $0xc0] sm:$0xff]
  %v44 = vld [vmem:[%s0 + $0xc8] sm:$0xff]
  %v45 = vld [vmem:[%s0 + $0xd0] sm:$0xff]
  %v46 = vld [vmem:[%s0 + $0xd8] sm:$0xff]
  %v47 = vld [vmem:[%s0 + $0xe0] sm:$0xff]
  %v48 = vld [vmem:[%s0 + $0xe8] sm:$0xff]
  %v49 = vld [vmem:[%s0 + $0xf0] sm:$0xff]
  %v50 = vld [vmem:[%s0 + $0xf8] sm:$0xff]
  %v51 = vld [vmem:[%s0 + $0x100] sm:$0xff]
  %v52 = vld [vmem:[%s0 + $0x108] sm:$0xff]
  %v53 = vld [vmem:[%s0 + $0x110] sm:$0xff]
  %v54 = vld [vmem:[%s0 + $0x118] sm:$0xff]
  %v56 = vlaneseq
  %v57 = vshrl.u32 %v56, 7
  %v58 = vsub.s32 0, %v57
  %v59 = vrot.slane %v18, %v58
  %vm61 = vcmask 203776
  %v63 = vsel %vm61, %v19, 0
  %v66 = vsel %vm61, %v20, 0
  %v69 = vsel %vm61, %v21, 0
  %v72 = vsel %vm61, %v22, 0
  %v75 = vsel %vm61, %v23, 0
  %v78 = vsel %vm61, %v24, 0
  %v81 = vsel %vm61, %v25, 0
  %v84 = vsel %vm61, %v26, 0
  %v87 = vsel %vm61, %v27, 0
  %v90 = vsel %vm61, %v28, 0
  %v93 = vsel %vm61, %v29, 0
  %v96 = vsel %vm61, %v30, 0
  %v99 = vsel %vm61, %v31, 0
  %v102 = vsel %vm61, %v32, 0
  %v105 = vsel %vm61, %v33, 0
  %v108 = vsel %vm61, %v34, 0
  %v111 = vsel %vm61, %v35, 0
  %v114 = vsel %vm61, %v36, 0
  %v117 = vsel %vm61, %v37, 0
  %v120 = vsel %vm61, %v38, 0
  %v123 = vsel %vm61, %v39, 0
  %v126 = vsel %vm61, %v40, 0
  %v129 = vsel %vm61, %v41, 0
  %v132 = vsel %vm61, %v42, 0
  %v135 = vsel %vm61, %v43, 0
  %v138 = vsel %vm61, %v44, 0
  %v141 = vsel %vm61, %v45, 0
  %v144 = vsel %vm61, %v46, 0
  %v147 = vsel %vm61, %v47, 0
  %v150 = vsel %vm61, %v48, 0
  %v153 = vsel %vm61, %v49, 0
  %v156 = vsel %vm61, %v50, 0
  %v159 = vsel %vm61, %v51, 0
  %v162 = vsel %vm61, %v52, 0
  %v165 = vsel %vm61, %v53, 0
  %v168 = vsel %vm61, %v54, 0
  %vm170 = vcmask 1040384
  %v172 = vsel %vm170, %v17, 0
  %174 = vmatprep.subr.mxu0 0.0
  %175 = vmatpush1.msra.mxu0 %v14
  %176 = vmatprep.subr.mxu0 0.0
  %177 = vmatpush1.msra.mxu0 %v15
  %178 = vmatprep.subr.mxu0 0.0
  %179 = vmatpush1.msra.mxu0 %v16
  %180 = vmatprep.subr.mxu0 0.0
  %181 = vmatpush1.msra.mxu0 %v172
  %182 = vmatprep.subr.mxu0 0.0
  %183 = vmatpush1.msra.mxu0 0.0
  %184 = vmatprep.subr.mxu0 0.0
  %185 = vmatpush1.msra.mxu0 0.0
  %186 = vmatprep.subr.mxu0 0.0
  %187 = vmatpush1.msra.mxu0 0.0
  %188 = vmatprep.subr.mxu0 0.0
  %189 = vmatpush1.msra.mxu0 0.0
  %190 = vmatprep.subr.mxu0 0.0
  %191 = vmatpush1.msra.mxu0 0.0
  %192 = vmatprep.subr.mxu0 0.0
  %193 = vmatpush1.msra.mxu0 0.0
  %194 = vmatprep.subr.mxu0 0.0
  %195 = vmatpush1.msra.mxu0 0.0
  %196 = vmatprep.subr.mxu0 0.0
  %197 = vmatpush1.msra.mxu0 0.0
  %198 = vmatprep.subr.mxu0 0.0
  %199 = vmatpush1.msra.mxu0 0.0
  %200 = vmatprep.subr.mxu0 0.0
  %201 = vmatpush1.msra.mxu0 0.0
  %202 = vmatprep.subr.mxu0 0.0
  %203 = vmatpush1.msra.mxu0 0.0
  %204 = vmatprep.subr.mxu0 0.0
  %205 = vmatpush1.msra.mxu0 0.0
  %206 = vmatprep.subr.mxu0 0.0
  %207 = vmatpush1.msra.mxu0 0.0
  %208 = vmatprep.subr.mxu0 0.0
  %209 = vmatpush1.msra.mxu0 0.0
  %210 = vmatprep.subr.mxu0 0.0
  %211 = vmatpush1.msra.mxu0 0.0
  %212 = vmatprep.subr.mxu0 0.0
  %213 = vmatpush1.msra.mxu0 0.0
  %214 = vmatprep.subr.mxu0 0.0
  %215 = vmatpush1.msra.mxu0 0.0
  %216 = vmatprep.subr.mxu0 0.0
  %217 = vmatpush1.msra.mxu0 0.0
  %218 = vmatprep.subr.mxu0 0.0
  %219 = vmatpush1.msra.mxu0 0.0
  %220 = vmatprep.subr.mxu0 0.0
  %221 = vmatpush1.msra.mxu0 0.0
  %222 = vmatprep.subr.mxu0 0.0
  %223 = vmatpush1.msra.mxu0 0.0
  %224 = vmatprep.subr.mxu0 0.0
  %225 = vmatpush1.msra.mxu0 0.0
  %226 = vmatprep.subr.mxu0 0.0
  %227 = vmatpush1.msra.mxu0 0.0
  %228 = vmatprep.subr.mxu0 0.0
  %229 = vmatpush1.msra.mxu0 0.0
  %230 = vmatprep.subr.mxu0 0.0
  %231 = vmatpush1.msra.mxu0 0.0
  %232 = vmatprep.subr.mxu0 0.0
  %233 = vmatpush1.msra.mxu0 0.0
  %234 = vmatprep.subr.mxu0 0.0
  %235 = vmatpush1.msra.mxu0 0.0
  %236 = vmatprep.subr.mxu0 0.0
  %237 = vmatpush1.msra.mxu0 0.0
  %238 = vmatprep.mubr.f32.mxu0 0.0
  %239 = vmatmul.mubr.f32.gmra.mrb[0].mxu0 %v63
  %v240 = vpop.f32.mrb[0].mxu0
  %v241 = vadd.f32 %v59, %v240
  %v242 = vpop.f32.mrb[0].mxu0
  %243 = vmatprep.mubr.f32.mxu0 0.0
  %244 = vmatmul.mubr.f32.gmra.mrb[0].mxu0 %v66
  %v245 = vpop.f32.mrb[0].mxu0
  %v246 = vadd.f32 %v59, %v245
  %v247 = vpop.f32.mrb[0].mxu0
  %248 = vmatprep.mubr.f32.mxu0 0.0
  %249 = vmatmul.mubr.f32.gmra.mrb[0].mxu0 %v69
  %v250 = vpop.f32.mrb[0].mxu0
  %v251 = vadd.f32 %v59, %v250
  %v252 = vpop.f32.mrb[0].mxu0
  %253 = vmatprep.mubr.f32.mxu0 0.0
  %254 = vmatmul.mubr.f32.gmra.mrb[0].mxu0 %v72
  %v255 = vpop.f32.mrb[0].mxu0
  %v256 = vadd.f32 %v59, %v255
  %v257 = vpop.f32.mrb[0].mxu0
  %258 = vmatprep.mubr.f32.mxu0 0.0
  %259 = vmatmul.mubr.f32.gmra.mrb[0].mxu0 %v75
  %v260 = vpop.f32.mrb[0].mxu0
  %v261 = vadd.f32 %v59, %v260
  %v262 = vpop.f32.mrb[0].mxu0
  %263 = vmatprep.mubr.f32.mxu0 0.0
  %264 = vmatmul.mubr.f32.gmra.mrb[0].mxu0 %v78
  %v265 = vpop.f32.mrb[0].mxu0
  %v266 = vadd.f32 %v59, %v265
  %v267 = vpop.f32.mrb[0].mxu0
  %268 = vmatprep.mubr.f32.mxu0 0.0
  %269 = vmatmul.mubr.f32.gmra.mrb[0].mxu0 %v81
  %v270 = vpop.f32.mrb[0].mxu0
  %v271 = vadd.f32 %v59, %v270
  %v272 = vpop.f32.mrb[0].mxu0
  %273 = vmatprep.mubr.f32.mxu0 0.0
  %274 = vmatmul.mubr.f32.gmra.mrb[0].mxu0 %v84
  %v275 = vpop.f32.mrb[0].mxu0
  %v276 = vadd.f32 %v59, %v275
  %v277 = vpop.f32.mrb[0].mxu0
  %278 = vmatprep.mubr.f32.mxu0 0.0
  %279 = vmatmul.mubr.f32.gmra.mrb[0].mxu0 %v87
  %v280 = vpop.f32.mrb[0].mxu0
  %v281 = vadd.f32 %v59, %v280
  %v282 = vpop.f32.mrb[0].mxu0
  %283 = vmatprep.mubr.f32.mxu0 0.0
  %284 = vmatmul.mubr.f32.gmra.mrb[0].mxu0 %v90
  %v285 = vpop.f32.mrb[0].mxu0
  %v286 = vadd.f32 %v59, %v285
  %v287 = vpop.f32.mrb[0].mxu0
  %288 = vmatprep.mubr.f32.mxu0 0.0
  %289 = vmatmul.mubr.f32.gmra.mrb[0].mxu0 %v93
  %v290 = vpop.f32.mrb[0].mxu0
  %v291 = vadd.f32 %v59, %v290
  %v292 = vpop.f32.mrb[0].mxu0
  %293 = vmatprep.mubr.f32.mxu0 0.0
  %294 = vmatmul.mubr.f32.gmra.mrb[0].mxu0 %v96
  %v295 = vpop.f32.mrb[0].mxu0
  %v296 = vadd.f32 %v59, %v295
  %v297 = vpop.f32.mrb[0].mxu0
  %298 = vmatprep.mubr.f32.mxu0 0.0
  %299 = vmatmul.mubr.f32.gmra.mrb[0].mxu0 %v99
  %v300 = vpop.f32.mrb[0].mxu0
  %v301 = vadd.f32 %v59, %v300
  %v302 = vpop.f32.mrb[0].mxu0
  %303 = vmatprep.mubr.f32.mxu0 0.0
  %304 = vmatmul.mubr.f32.gmra.mrb[0].mxu0 %v102
  %v305 = vpop.f32.mrb[0].mxu0
  %v306 = vadd.f32 %v59, %v305
  %v307 = vpop.f32.mrb[0].mxu0
  %308 = vmatprep.mubr.f32.mxu0 0.0
  %309 = vmatmul.mubr.f32.gmra.mrb[0].mxu0 %v105
  %v310 = vpop.f32.mrb[0].mxu0
  %v311 = vadd.f32 %v59, %v310
  %v312 = vpop.f32.mrb[0].mxu0
  %313 = vmatprep.mubr.f32.mxu0 0.0
  %314 = vmatmul.mubr.f32.gmra.mrb[0].mxu0 %v108
  %v315 = vpop.f32.mrb[0].mxu0
  %v316 = vadd.f32 %v59, %v315
  %v317 = vpop.f32.mrb[0].mxu0
  %318 = vmatprep.mubr.f32.mxu0 0.0
  %319 = vmatmul.mubr.f32.gmra.mrb[0].mxu0 %v111
  %v320 = vpop.f32.mrb[0].mxu0
  %v321 = vadd.f32 %v59, %v320
  %v322 = vpop.f32.mrb[0].mxu0
  %323 = vmatprep.mubr.f32.mxu0 0.0
  %324 = vmatmul.mubr.f32.gmra.mrb[0].mxu0 %v114
  %v325 = vpop.f32.mrb[0].mxu0
  %v326 = vadd.f32 %v59, %v325
  %v327 = vpop.f32.mrb[0].mxu0
  %328 = vmatprep.mubr.f32.mxu0 0.0
  %329 = vmatmul.mubr.f32.gmra.mrb[0].mxu0 %v117
  %v330 = vpop.f32.mrb[0].mxu0
  %v331 = vadd.f32 %v59, %v330
  %v332 = vpop.f32.mrb[0].mxu0
  %333 = vmatprep.mubr.f32.mxu0 0.0
  %334 = vmatmul.mubr.f32.gmra.mrb[0].mxu0 %v120
  %v335 = vpop.f32.mrb[0].mxu0
  %v336 = vadd.f32 %v59, %v335
  %v337 = vpop.f32.mrb[0].mxu0
  %338 = vmatprep.mubr.f32.mxu0 0.0
  %339 = vmatmul.mubr.f32.gmra.mrb[0].mxu0 %v123
  %v340 = vpop.f32.mrb[0].mxu0
  %v341 = vadd.f32 %v59, %v340
  %v342 = vpop.f32.mrb[0].mxu0
  %343 = vmatprep.mubr.f32.mxu0 0.0
  %344 = vmatmul.mubr.f32.gmra.mrb[0].mxu0 %v126
  %v345 = vpop.f32.mrb[0].mxu0
  %v346 = vadd.f32 %v59, %v345
  %v347 = vpop.f32.mrb[0].mxu0
  %348 = vmatprep.mubr.f32.mxu0 0.0
  %349 = vmatmul.mubr.f32.gmra.mrb[0].mxu0 %v129
  %v350 = vpop.f32.mrb[0].mxu0
  %v351 = vadd.f32 %v59, %v350
  %v352 = vpop.f32.mrb[0].mxu0
  %353 = vmatprep.mubr.f32.mxu0 0.0
  %354 = vmatmul.mubr.f32.gmra.mrb[0].mxu0 %v132
  %v355 = vpop.f32.mrb[0].mxu0
  %v356 = vadd.f32 %v59, %v355
  %v357 = vpop.f32.mrb[0].mxu0
  %358 = vmatprep.mubr.f32.mxu0 0.0
  %359 = vmatmul.mubr.f32.gmra.mrb[0].mxu0 %v135
  %v360 = vpop.f32.mrb[0].mxu0
  %v361 = vadd.f32 %v59, %v360
  %v362 = vpop.f32.mrb[0].mxu0
  %363 = vmatprep.mubr.f32.mxu0 0.0
  %364 = vmatmul.mubr.f32.gmra.mrb[0].mxu0 %v138
  %v365 = vpop.f32.mrb[0].mxu0
  %v366 = vadd.f32 %v59, %v365
  %v367 = vpop.f32.mrb[0].mxu0
  %368 = vmatprep.mubr.f32.mxu0 0.0
  %369 = vmatmul.mubr.f32.gmra.mrb[0].mxu0 %v141
  %v370 = vpop.f32.mrb[0].mxu0
  %v371 = vadd.f32 %v59, %v370
  %v372 = vpop.f32.mrb[0].mxu0
  %373 = vmatprep.mubr.f32.mxu0 0.0
  %374 = vmatmul.mubr.f32.gmra.mrb[0].mxu0 %v144
  %v375 = vpop.f32.mrb[0].mxu0
  %v376 = vadd.f32 %v59, %v375
  %v377 = vpop.f32.mrb[0].mxu0
  %378 = vmatprep.mubr.f32.mxu0 0.0
  %379 = vmatmul.mubr.f32.gmra.mrb[0].mxu0 %v147
  %v380 = vpop.f32.mrb[0].mxu0
  %v381 = vadd.f32 %v59, %v380
  %v382 = vpop.f32.mrb[0].mxu0
  %383 = vmatprep.mubr.f32.mxu0 0.0
  %384 = vmatmul.mubr.f32.gmra.mrb[0].mxu0 %v150
  %v385 = vpop.f32.mrb[0].mxu0
  %v386 = vadd.f32 %v59, %v385
  %v387 = vpop.f32.mrb[0].mxu0
  %388 = vmatprep.mubr.f32.mxu0 0.0
  %389 = vmatmul.mubr.f32.gmra.mrb[0].mxu0 %v153
  %v390 = vpop.f32.mrb[0].mxu0
  %v391 = vadd.f32 %v59, %v390
  %v392 = vpop.f32.mrb[0].mxu0
  %393 = vmatprep.mubr.f32.mxu0 0.0
  %394 = vmatmul.mubr.f32.gmra.mrb[0].mxu0 %v156
  %v395 = vpop.f32.mrb[0].mxu0
  %v396 = vadd.f32 %v59, %v395
  %v397 = vpop.f32.mrb[0].mxu0
  %398 = vmatprep.mubr.f32.mxu0 0.0
  %399 = vmatmul.mubr.f32.gmra.mrb[0].mxu0 %v159
  %v400 = vpop.f32.mrb[0].mxu0
  %v401 = vadd.f32 %v59, %v400
  %v402 = vpop.f32.mrb[0].mxu0
  %403 = vmatprep.mubr.f32.mxu0 0.0
  %404 = vmatmul.mubr.f32.gmra.mrb[0].mxu0 %v162
  %v405 = vpop.f32.mrb[0].mxu0
  %v406 = vadd.f32 %v59, %v405
  %v407 = vpop.f32.mrb[0].mxu0
  %408 = vmatprep.mubr.f32.mxu0 0.0
  %409 = vmatmul.mubr.f32.gmra.mrb[0].mxu0 %v165
  %v410 = vpop.f32.mrb[0].mxu0
  %v411 = vadd.f32 %v59, %v410
  %v412 = vpop.f32.mrb[0].mxu0
  %413 = vmatprep.mubr.f32.mxu0 0.0
  %414 = vmatmul.mubr.f32.gmra.mrb[0].mxu0 %v168
  %v415 = vpop.f32.mrb[0].mxu0
  %v416 = vadd.f32 %v59, %v415
  %v417 = vpop.f32.mrb[0].mxu0
  %418 = vdwg.mxu0
  %v419 = vtanh.pop %v241
  %v420 = vtanh.pop %v246
  %v421 = vtanh.pop %v251
  %v422 = vtanh.pop %v256
  %v423 = vtanh.pop %v261
  %v424 = vtanh.pop %v266
  %v425 = vtanh.pop %v271
  %v426 = vtanh.pop %v276
  %v427 = vtanh.pop %v281
  %v428 = vtanh.pop %v286
  %v429 = vtanh.pop %v291
  %v430 = vtanh.pop %v296
  %v431 = vtanh.pop %v301
  %v432 = vtanh.pop %v306
  %v433 = vtanh.pop %v311
  %v434 = vtanh.pop %v316
  %v435 = vtanh.pop %v321
  %v436 = vtanh.pop %v326
  %v437 = vtanh.pop %v331
  %v438 = vtanh.pop %v336
  %v439 = vtanh.pop %v341
  %v440 = vtanh.pop %v346
  %v441 = vtanh.pop %v351
  %v442 = vtanh.pop %v356
  %v443 = vtanh.pop %v361
  %v444 = vtanh.pop %v366
  %v445 = vtanh.pop %v371
  %v446 = vtanh.pop %v376
  %v447 = vtanh.pop %v381
  %v448 = vtanh.pop %v386
  %v449 = vtanh.pop %v391
  %v450 = vtanh.pop %v396
  %v451 = vtanh.pop %v401
  %v452 = vtanh.pop %v406
  %v453 = vtanh.pop %v411
  %v454 = vtanh.pop %v416
  %s455 = scalar_lea.vmem %s0, 288
  %v456 = vld [vmem:[%s455] sm:$0xff]
  %v457 = vld [vmem:[%s455 + $0x8] sm:$0xff]
  %v458 = vld [vmem:[%s455 + $0x10] sm:$0xff]
  %v459 = vld [vmem:[%s455 + $0x18] sm:$0xff]
  %v460 = vld [vmem:[%s455 + $0x20] sm:$0xff]
  %v461 = vld [vmem:[%s455 + $0x28] sm:$0xff]
  %v462 = vld [vmem:[%s455 + $0x30] sm:$0xff]
  %v463 = vld [vmem:[%s455 + $0x38] sm:$0xff]
  %v464 = vld [vmem:[%s455 + $0x40] sm:$0xff]
  %v465 = vld [vmem:[%s455 + $0x48] sm:$0xff]
  %v466 = vld [vmem:[%s455 + $0x50] sm:$0xff]
  %v467 = vld [vmem:[%s455 + $0x58] sm:$0xff]
  %v468 = vld [vmem:[%s455 + $0x60] sm:$0xff]
  %v469 = vld [vmem:[%s455 + $0x68] sm:$0xff]
  %v470 = vld [vmem:[%s455 + $0x70] sm:$0xff]
  %v471 = vld [vmem:[%s455 + $0x78] sm:$0xff]
  %v472 = vld [vmem:[%s455 + $0x80] sm:$0xff]
  %v473 = vld [vmem:[%s455 + $0x88] sm:$0xff]
  %v474 = vld [vmem:[%s455 + $0x90] sm:$0xff]
  %v475 = vld [vmem:[%s455 + $0x98] sm:$0xff]
  %v476 = vld [vmem:[%s455 + $0xa0] sm:$0xff]
  %v477 = vld [vmem:[%s455 + $0xa8] sm:$0xff]
  %v478 = vld [vmem:[%s455 + $0xb0] sm:$0xff]
  %v479 = vld [vmem:[%s455 + $0xb8] sm:$0xff]
  %v480 = vld [vmem:[%s455 + $0xc0] sm:$0xff]
  %v481 = vld [vmem:[%s455 + $0xc8] sm:$0xff]
  %v482 = vld [vmem:[%s455 + $0xd0] sm:$0xff]
  %v483 = vld [vmem:[%s455 + $0xd8] sm:$0xff]
  %v484 = vld [vmem:[%s455 + $0xe0] sm:$0xff]
  %v485 = vld [vmem:[%s455 + $0xe8] sm:$0xff]
  %v486 = vld [vmem:[%s455 + $0xf0] sm:$0xff]
  %v487 = vld [vmem:[%s455 + $0xf8] sm:$0xff]
  %v488 = vld [vmem:[%s455 + $0x100] sm:$0xff]
  %v489 = vld [vmem:[%s455 + $0x108] sm:$0xff]
  %v490 = vld [vmem:[%s455 + $0x110] sm:$0xff]
  %v491 = vld [vmem:[%s455 + $0x118] sm:$0xff]
  %v493 = vsel %vm61, %v456, 0
  %v496 = vsel %vm61, %v457, 0
  %v499 = vsel %vm61, %v458, 0
  %v502 = vsel %vm61, %v459, 0
  %v505 = vsel %vm61, %v460, 0
  %v508 = vsel %vm61, %v461, 0
  %v511 = vsel %vm61, %v462, 0
  %v514 = vsel %vm61, %v463, 0
  %v517 = vsel %vm61, %v464, 0
  %v520 = vsel %vm61, %v465, 0
  %v523 = vsel %vm61, %v466, 0
  %v526 = vsel %vm61, %v467, 0
  %v529 = vsel %vm61, %v468, 0
  %v532 = vsel %vm61, %v469, 0
  %v535 = vsel %vm61, %v470, 0
  %v538 = vsel %vm61, %v471, 0
  %v541 = vsel %vm61, %v472, 0
  %v544 = vsel %vm61, %v473, 0
  %v547 = vsel %vm61, %v474, 0
  %v550 = vsel %vm61, %v475, 0
  %v553 = vsel %vm61, %v476, 0
  %v556 = vsel %vm61, %v477, 0
  %v559 = vsel %vm61, %v478, 0
  %v562 = vsel %vm61, %v479, 0
  %v565 = vsel %vm61, %v480, 0
  %v568 = vsel %vm61, %v481, 0
  %v571 = vsel %vm61, %v482, 0
  %v574 = vsel %vm61, %v483, 0
  %v577 = vsel %vm61, %v484, 0
  %v580 = vsel %vm61, %v485, 0
  %v583 = vsel %vm61, %v486, 0
  %v586 = vsel %vm61, %v487, 0
  %v589 = vsel %vm61, %v488, 0
  %v592 = vsel %vm61, %v489, 0
  %v595 = vsel %vm61, %v490, 0
  %v598 = vsel %vm61, %v491, 0
  %600 = vmatprep.subr.mxu0 0.0
  %601 = vmatpush1.msra.mxu0 %v14
  %602 = vmatprep.subr.mxu0 0.0
  %603 = vmatpush1.msra.mxu0 %v15
  %604 = vmatprep.subr.mxu0 0.0
  %605 = vmatpush1.msra.mxu0 %v16
  %606 = vmatprep.subr.mxu0 0.0
  %607 = vmatpush1.msra.mxu0 %v172
  %608 = vmatprep.subr.mxu0 0.0
  %609 = vmatpush1.msra.mxu0 0.0
  %610 = vmatprep.subr.mxu0 0.0
  %611 = vmatpush1.msra.mxu0 0.0
  %612 = vmatprep.subr.mxu0 0.0
  %613 = vmatpush1.msra.mxu0 0.0
  %614 = vmatprep.subr.mxu0 0.0
  %615 = vmatpush1.msra.mxu0 0.0
  %616 = vmatprep.subr.mxu0 0.0
  %617 = vmatpush1.msra.mxu0 0.0
  %618 = vmatprep.subr.mxu0 0.0
  %619 = vmatpush1.msra.mxu0 0.0
  %620 = vmatprep.subr.mxu0 0.0
  %621 = vmatpush1.msra.mxu0 0.0
  %622 = vmatprep.subr.mxu0 0.0
  %623 = vmatpush1.msra.mxu0 0.0
  %624 = vmatprep.subr.mxu0 0.0
  %625 = vmatpush1.msra.mxu0 0.0
  %626 = vmatprep.subr.mxu0 0.0
  %627 = vmatpush1.msra.mxu0 0.0
  %628 = vmatprep.subr.mxu0 0.0
  %629 = vmatpush1.msra.mxu0 0.0
  %630 = vmatprep.subr.mxu0 0.0
  %631 = vmatpush1.msra.mxu0 0.0
  %632 = vmatprep.subr.mxu0 0.0
  %633 = vmatpush1.msra.mxu0 0.0
  %634 = vmatprep.subr.mxu0 0.0
  %635 = vmatpush1.msra.mxu0 0.0
  %636 = vmatprep.subr.mxu0 0.0
  %637 = vmatpush1.msra.mxu0 0.0
  %638 = vmatprep.subr.mxu0 0.0
  %639 = vmatpush1.msra.mxu0 0.0
  %640 = vmatprep.subr.mxu0 0.0
  %641 = vmatpush1.msra.mxu0 0.0
  %642 = vmatprep.subr.mxu0 0.0
  %643 = vmatpush1.msra.mxu0 0.0
  %644 = vmatprep.subr.mxu0 0.0
  %645 = vmatpush1.msra.mxu0 0.0
  %646 = vmatprep.subr.mxu0 0.0
  %647 = vmatpush1.msra.mxu0 0.0
  %648 = vmatprep.subr.mxu0 0.0
  %649 = vmatpush1.msra.mxu0 0.0
  %650 = vmatprep.subr.mxu0 0.0
  %651 = vmatpush1.msra.mxu0 0.0
  %652 = vmatprep.subr.mxu0 0.0
  %653 = vmatpush1.msra.mxu0 0.0
  %654 = vmatprep.subr.mxu0 0.0
  %655 = vmatpush1.msra.mxu0 0.0
  %656 = vmatprep.subr.mxu0 0.0
  %657 = vmatpush1.msra.mxu0 0.0
  %658 = vmatprep.subr.mxu0 0.0
  %659 = vmatpush1.msra.mxu0 0.0
  %660 = vmatprep.subr.mxu0 0.0
  %661 = vmatpush1.msra.mxu0 0.0
  %662 = vmatprep.subr.mxu0 0.0
  %663 = vmatpush1.msra.mxu0 0.0
  %664 = vmatprep.mubr.f32.mxu0 0.0
  %665 = vmatmul.mubr.f32.gmra.mrb[0].mxu0 %v493
  %v666 = vpop.f32.mrb[0].mxu0
  %v667 = vadd.f32 %v59, %v666
  %v668 = vpop.f32.mrb[0].mxu0
  %669 = vmatprep.mubr.f32.mxu0 0.0
  %670 = vmatmul.mubr.f32.gmra.mrb[0].mxu0 %v496
  %v671 = vpop.f32.mrb[0].mxu0
  %v672 = vadd.f32 %v59, %v671
  %v673 = vpop.f32.mrb[0].mxu0
  %674 = vmatprep.mubr.f32.mxu0 0.0
  %675 = vmatmul.mubr.f32.gmra.mrb[0].mxu0 %v499
  %v676 = vpop.f32.mrb[0].mxu0
  %v677 = vadd.f32 %v59, %v676
  %v678 = vpop.f32.mrb[0].mxu0
  %679 = vmatprep.mubr.f32.mxu0 0.0
  %680 = vmatmul.mubr.f32.gmra.mrb[0].mxu0 %v502
  %v681 = vpop.f32.mrb[0].mxu0
  %v682 = vadd.f32 %v59, %v681
  %v683 = vpop.f32.mrb[0].mxu0
  %684 = vmatprep.mubr.f32.mxu0 0.0
  %685 = vmatmul.mubr.f32.gmra.mrb[0].mxu0 %v505
  %v686 = vpop.f32.mrb[0].mxu0
  %v687 = vadd.f32 %v59, %v686
  %v688 = vpop.f32.mrb[0].mxu0
  %689 = vmatprep.mubr.f32.mxu0 0.0
  %690 = vmatmul.mubr.f32.gmra.mrb[0].mxu0 %v508
  %v691 = vpop.f32.mrb[0].mxu0
  %v692 = vadd.f32 %v59, %v691
  %v693 = vpop.f32.mrb[0].mxu0
  %694 = vmatprep.mubr.f32.mxu0 0.0
  %695 = vmatmul.mubr.f32.gmra.mrb[0].mxu0 %v511
  %v696 = vpop.f32.mrb[0].mxu0
  %v697 = vadd.f32 %v59, %v696
  %v698 = vpop.f32.mrb[0].mxu0
  %699 = vmatprep.mubr.f32.mxu0 0.0
  %700 = vmatmul.mubr.f32.gmra.mrb[0].mxu0 %v514
  %v701 = vpop.f32.mrb[0].mxu0
  %v702 = vadd.f32 %v59, %v701
  %v703 = vpop.f32.mrb[0].mxu0
  %704 = vmatprep.mubr.f32.mxu0 0.0
  %705 = vmatmul.mubr.f32.gmra.mrb[0].mxu0 %v517
  %v706 = vpop.f32.mrb[0].mxu0
  %v707 = vadd.f32 %v59, %v706
  %v708 = vpop.f32.mrb[0].mxu0
  %709 = vmatprep.mubr.f32.mxu0 0.0
  %710 = vmatmul.mubr.f32.gmra.mrb[0].mxu0 %v520
  %v711 = vpop.f32.mrb[0].mxu0
  %v712 = vadd.f32 %v59, %v711
  %v713 = vpop.f32.mrb[0].mxu0
  %714 = vmatprep.mubr.f32.mxu0 0.0
  %715 = vmatmul.mubr.f32.gmra.mrb[0].mxu0 %v523
  %v716 = vpop.f32.mrb[0].mxu0
  %v717 = vadd.f32 %v59, %v716
  %v718 = vpop.f32.mrb[0].mxu0
  %719 = vmatprep.mubr.f32.mxu0 0.0
  %720 = vmatmul.mubr.f32.gmra.mrb[0].mxu0 %v526
  %v721 = vpop.f32.mrb[0].mxu0
  %v722 = vadd.f32 %v59, %v721
  %v723 = vpop.f32.mrb[0].mxu0
  %724 = vmatprep.mubr.f32.mxu0 0.0
  %725 = vmatmul.mubr.f32.gmra.mrb[0].mxu0 %v529
  %v726 = vpop.f32.mrb[0].mxu0
  %v727 = vadd.f32 %v59, %v726
  %v728 = vpop.f32.mrb[0].mxu0
  %729 = vmatprep.mubr.f32.mxu0 0.0
  %730 = vmatmul.mubr.f32.gmra.mrb[0].mxu0 %v532
  %v731 = vpop.f32.mrb[0].mxu0
  %v732 = vadd.f32 %v59, %v731
  %v733 = vpop.f32.mrb[0].mxu0
  %734 = vmatprep.mubr.f32.mxu0 0.0
  %735 = vmatmul.mubr.f32.gmra.mrb[0].mxu0 %v535
  %v736 = vpop.f32.mrb[0].mxu0
  %v737 = vadd.f32 %v59, %v736
  %v738 = vpop.f32.mrb[0].mxu0
  %739 = vmatprep.mubr.f32.mxu0 0.0
  %740 = vmatmul.mubr.f32.gmra.mrb[0].mxu0 %v538
  %v741 = vpop.f32.mrb[0].mxu0
  %v742 = vadd.f32 %v59, %v741
  %v743 = vpop.f32.mrb[0].mxu0
  %744 = vmatprep.mubr.f32.mxu0 0.0
  %745 = vmatmul.mubr.f32.gmra.mrb[0].mxu0 %v541
  %v746 = vpop.f32.mrb[0].mxu0
  %v747 = vadd.f32 %v59, %v746
  %v748 = vpop.f32.mrb[0].mxu0
  %749 = vmatprep.mubr.f32.mxu0 0.0
  %750 = vmatmul.mubr.f32.gmra.mrb[0].mxu0 %v544
  %v751 = vpop.f32.mrb[0].mxu0
  %v752 = vadd.f32 %v59, %v751
  %v753 = vpop.f32.mrb[0].mxu0
  %754 = vmatprep.mubr.f32.mxu0 0.0
  %755 = vmatmul.mubr.f32.gmra.mrb[0].mxu0 %v547
  %v756 = vpop.f32.mrb[0].mxu0
  %v757 = vadd.f32 %v59, %v756
  %v758 = vpop.f32.mrb[0].mxu0
  %759 = vmatprep.mubr.f32.mxu0 0.0
  %760 = vmatmul.mubr.f32.gmra.mrb[0].mxu0 %v550
  %v761 = vpop.f32.mrb[0].mxu0
  %v762 = vadd.f32 %v59, %v761
  %v763 = vpop.f32.mrb[0].mxu0
  %764 = vmatprep.mubr.f32.mxu0 0.0
  %765 = vmatmul.mubr.f32.gmra.mrb[0].mxu0 %v553
  %v766 = vpop.f32.mrb[0].mxu0
  %v767 = vadd.f32 %v59, %v766
  %v768 = vpop.f32.mrb[0].mxu0
  %769 = vmatprep.mubr.f32.mxu0 0.0
  %770 = vmatmul.mubr.f32.gmra.mrb[0].mxu0 %v556
  %v771 = vpop.f32.mrb[0].mxu0
  %v772 = vadd.f32 %v59, %v771
  %v773 = vpop.f32.mrb[0].mxu0
  %774 = vmatprep.mubr.f32.mxu0 0.0
  %775 = vmatmul.mubr.f32.gmra.mrb[0].mxu0 %v559
  %v776 = vpop.f32.mrb[0].mxu0
  %v777 = vadd.f32 %v59, %v776
  %v778 = vpop.f32.mrb[0].mxu0
  %779 = vmatprep.mubr.f32.mxu0 0.0
  %780 = vmatmul.mubr.f32.gmra.mrb[0].mxu0 %v562
  %v781 = vpop.f32.mrb[0].mxu0
  %v782 = vadd.f32 %v59, %v781
  %v783 = vpop.f32.mrb[0].mxu0
  %784 = vmatprep.mubr.f32.mxu0 0.0
  %785 = vmatmul.mubr.f32.gmra.mrb[0].mxu0 %v565
  %v786 = vpop.f32.mrb[0].mxu0
  %v787 = vadd.f32 %v59, %v786
  %v788 = vpop.f32.mrb[0].mxu0
  %789 = vmatprep.mubr.f32.mxu0 0.0
  %790 = vmatmul.mubr.f32.gmra.mrb[0].mxu0 %v568
  %v791 = vpop.f32.mrb[0].mxu0
  %v792 = vadd.f32 %v59, %v791
  %v793 = vpop.f32.mrb[0].mxu0
  %794 = vmatprep.mubr.f32.mxu0 0.0
  %795 = vmatmul.mubr.f32.gmra.mrb[0].mxu0 %v571
  %v796 = vpop.f32.mrb[0].mxu0
  %v797 = vadd.f32 %v59, %v796
  %v798 = vpop.f32.mrb[0].mxu0
  %799 = vmatprep.mubr.f32.mxu0 0.0
  %800 = vmatmul.mubr.f32.gmra.mrb[0].mxu0 %v574
  %v801 = vpop.f32.mrb[0].mxu0
  %v802 = vadd.f32 %v59, %v801
  %v803 = vpop.f32.mrb[0].mxu0
  %804 = vmatprep.mubr.f32.mxu0 0.0
  %805 = vmatmul.mubr.f32.gmra.mrb[0].mxu0 %v577
  %v806 = vpop.f32.mrb[0].mxu0
  %v807 = vadd.f32 %v59, %v806
  %v808 = vpop.f32.mrb[0].mxu0
  %809 = vmatprep.mubr.f32.mxu0 0.0
  %810 = vmatmul.mubr.f32.gmra.mrb[0].mxu0 %v580
  %v811 = vpop.f32.mrb[0].mxu0
  %v812 = vadd.f32 %v59, %v811
  %v813 = vpop.f32.mrb[0].mxu0
  %814 = vmatprep.mubr.f32.mxu0 0.0
  %815 = vmatmul.mubr.f32.gmra.mrb[0].mxu0 %v583
  %v816 = vpop.f32.mrb[0].mxu0
  %v817 = vadd.f32 %v59, %v816
  %v818 = vpop.f32.mrb[0].mxu0
  %819 = vmatprep.mubr.f32.mxu0 0.0
  %820 = vmatmul.mubr.f32.gmra.mrb[0].mxu0 %v586
  %v821 = vpop.f32.mrb[0].mxu0
  %v822 = vadd.f32 %v59, %v821
  %v823 = vpop.f32.mrb[0].mxu0
  %824 = vmatprep.mubr.f32.mxu0 0.0
  %825 = vmatmul.mubr.f32.gmra.mrb[0].mxu0 %v589
  %v826 = vpop.f32.mrb[0].mxu0
  %v827 = vadd.f32 %v59, %v826
  %v828 = vpop.f32.mrb[0].mxu0
  %829 = vmatprep.mubr.f32.mxu0 0.0
  %830 = vmatmul.mubr.f32.gmra.mrb[0].mxu0 %v592
  %v831 = vpop.f32.mrb[0].mxu0
  %v832 = vadd.f32 %v59, %v831
  %v833 = vpop.f32.mrb[0].mxu0
  %834 = vmatprep.mubr.f32.mxu0 0.0
  %835 = vmatmul.mubr.f32.gmra.mrb[0].mxu0 %v595
  %v836 = vpop.f32.mrb[0].mxu0
  %v837 = vadd.f32 %v59, %v836
  %v838 = vpop.f32.mrb[0].mxu0
  %839 = vmatprep.mubr.f32.mxu0 0.0
  %840 = vmatmul.mubr.f32.gmra.mrb[0].mxu0 %v598
  %v841 = vpop.f32.mrb[0].mxu0
  %v842 = vadd.f32 %v59, %v841
  %v843 = vpop.f32.mrb[0].mxu0
  %844 = vdwg.mxu0
  %v845 = vtanh.pop %v667
  %v846 = vtanh.pop %v672
  %v847 = vtanh.pop %v677
  %v848 = vtanh.pop %v682
  %v849 = vtanh.pop %v687
  %v850 = vtanh.pop %v692
  %v851 = vtanh.pop %v697
  %v852 = vtanh.pop %v702
  %v853 = vtanh.pop %v707
  %v854 = vtanh.pop %v712
  %v855 = vtanh.pop %v717
  %v856 = vtanh.pop %v722
  %v857 = vtanh.pop %v727
  %v858 = vtanh.pop %v732
  %v859 = vtanh.pop %v737
  %v860 = vtanh.pop %v742
  %v861 = vtanh.pop %v747
  %v862 = vtanh.pop %v752
  %v863 = vtanh.pop %v757
  %v864 = vtanh.pop %v762
  %v865 = vtanh.pop %v767
  %v866 = vtanh.pop %v772
  %v867 = vtanh.pop %v777
  %v868 = vtanh.pop %v782
  %v869 = vtanh.pop %v787
  %v870 = vtanh.pop %v792
  %v871 = vtanh.pop %v797
  %v872 = vtanh.pop %v802
  %v873 = vtanh.pop %v807
  %v874 = vtanh.pop %v812
  %v875 = vtanh.pop %v817
  %v876 = vtanh.pop %v822
  %v877 = vtanh.pop %v827
  %v878 = vtanh.pop %v832
  %v879 = vtanh.pop %v837
  %v880 = vtanh.pop %v842
  %s881 = scalar_lea.vmem %s0, 576
  %v882 = vld [vmem:[%s881] sm:$0xff]
  %v883 = vld [vmem:[%s881 + $0x8] sm:$0xff]
  %v884 = vld [vmem:[%s881 + $0x10] sm:$0xff]
  %v885 = vld [vmem:[%s881 + $0x18] sm:$0xff]
  %v886 = vld [vmem:[%s881 + $0x20] sm:$0xff]
  %v887 = vld [vmem:[%s881 + $0x28] sm:$0xff]
  %v888 = vld [vmem:[%s881 + $0x30] sm:$0xff]
  %v889 = vld [vmem:[%s881 + $0x38] sm:$0xff]
  %v890 = vld [vmem:[%s881 + $0x40] sm:$0xff]
  %v891 = vld [vmem:[%s881 + $0x48] sm:$0xff]
  %v892 = vld [vmem:[%s881 + $0x50] sm:$0xff]
  %v893 = vld [vmem:[%s881 + $0x58] sm:$0xff]
  %v894 = vld [vmem:[%s881 + $0x60] sm:$0xff]
  %v895 = vld [vmem:[%s881 + $0x68] sm:$0xff]
  %v896 = vld [vmem:[%s881 + $0x70] sm:$0xff]
  %v897 = vld [vmem:[%s881 + $0x78] sm:$0xff]
  %v898 = vld [vmem:[%s881 + $0x80] sm:$0xff]
  %v899 = vld [vmem:[%s881 + $0x88] sm:$0xff]
  %v900 = vld [vmem:[%s881 + $0x90] sm:$0xff]
  %v901 = vld [vmem:[%s881 + $0x98] sm:$0xff]
  %v902 = vld [vmem:[%s881 + $0xa0] sm:$0xff]
  %v903 = vld [vmem:[%s881 + $0xa8] sm:$0xff]
  %v904 = vld [vmem:[%s881 + $0xb0] sm:$0xff]
  %v905 = vld [vmem:[%s881 + $0xb8] sm:$0xff]
  %v906 = vld [vmem:[%s881 + $0xc0] sm:$0xff]
  %v907 = vld [vmem:[%s881 + $0xc8] sm:$0xff]
  %v908 = vld [vmem:[%s881 + $0xd0] sm:$0xff]
  %v909 = vld [vmem:[%s881 + $0xd8] sm:$0xff]
  %v910 = vld [vmem:[%s881 + $0xe0] sm:$0xff]
  %v911 = vld [vmem:[%s881 + $0xe8] sm:$0xff]
  %v912 = vld [vmem:[%s881 + $0xf0] sm:$0xff]
  %v913 = vld [vmem:[%s881 + $0xf8] sm:$0xff]
  %v914 = vld [vmem:[%s881 + $0x100] sm:$0xff]
  %v915 = vld [vmem:[%s881 + $0x108] sm:$0xff]
  %v916 = vld [vmem:[%s881 + $0x110] sm:$0xff]
  %v917 = vld [vmem:[%s881 + $0x118] sm:$0xff]
  %v919 = vsel %vm61, %v882, 0
  %v922 = vsel %vm61, %v883, 0
  %v925 = vsel %vm61, %v884, 0
  %v928 = vsel %vm61, %v885, 0
  %v931 = vsel %vm61, %v886, 0
  %v934 = vsel %vm61, %v887, 0
  %v937 = vsel %vm61, %v888, 0
  %v940 = vsel %vm61, %v889, 0
  %v943 = vsel %vm61, %v890, 0
  %v946 = vsel %vm61, %v891, 0
  %v949 = vsel %vm61, %v892, 0
  %v952 = vsel %vm61, %v893, 0
  %v955 = vsel %vm61, %v894, 0
  %v958 = vsel %vm61, %v895, 0
  %v961 = vsel %vm61, %v896, 0
  %v964 = vsel %vm61, %v897, 0
  %v967 = vsel %vm61, %v898, 0
  %v970 = vsel %vm61, %v899, 0
  %v973 = vsel %vm61, %v900, 0
  %v976 = vsel %vm61, %v901, 0
  %v979 = vsel %vm61, %v902, 0
  %v982 = vsel %vm61, %v903, 0
  %v985 = vsel %vm61, %v904, 0
  %v988 = vsel %vm61, %v905, 0
  %v991 = vsel %vm61, %v906, 0
  %v994 = vsel %vm61, %v907, 0
  %v997 = vsel %vm61, %v908, 0
  %v1000 = vsel %vm61, %v909, 0
  %v1003 = vsel %vm61, %v910, 0
  %v1006 = vsel %vm61, %v911, 0
  %v1009 = vsel %vm61, %v912, 0
  %v1012 = vsel %vm61, %v913, 0
  %v1015 = vsel %vm61, %v914, 0
  %v1018 = vsel %vm61, %v915, 0
  %v1021 = vsel %vm61, %v916, 0
  %v1024 = vsel %vm61, %v917, 0
  %1026 = vmatprep.subr.mxu0 0.0
  %1027 = vmatpush1.msra.mxu0 %v14
  %1028 = vmatprep.subr.mxu0 0.0
  %1029 = vmatpush1.msra.mxu0 %v15
  %1030 = vmatprep.subr.mxu0 0.0
  %1031 = vmatpush1.msra.mxu0 %v16
  %1032 = vmatprep.subr.mxu0 0.0
  %1033 = vmatpush1.msra.mxu0 %v172
  %1034 = vmatprep.subr.mxu0 0.0
  %1035 = vmatpush1.msra.mxu0 0.0
  %1036 = vmatprep.subr.mxu0 0.0
  %1037 = vmatpush1.msra.mxu0 0.0
  %1038 = vmatprep.subr.mxu0 0.0
  %1039 = vmatpush1.msra.mxu0 0.0
  %1040 = vmatprep.subr.mxu0 0.0
  %1041 = vmatpush1.msra.mxu0 0.0
  %1042 = vmatprep.subr.mxu0 0.0
  %1043 = vmatpush1.msra.mxu0 0.0
  %1044 = vmatprep.subr.mxu0 0.0
  %1045 = vmatpush1.msra.mxu0 0.0
  %1046 = vmatprep.subr.mxu0 0.0
  %1047 = vmatpush1.msra.mxu0 0.0
  %1048 = vmatprep.subr.mxu0 0.0
  %1049 = vmatpush1.msra.mxu0 0.0
  %1050 = vmatprep.subr.mxu0 0.0
  %1051 = vmatpush1.msra.mxu0 0.0
  %1052 = vmatprep.subr.mxu0 0.0
  %1053 = vmatpush1.msra.mxu0 0.0
  %1054 = vmatprep.subr.mxu0 0.0
  %1055 = vmatpush1.msra.mxu0 0.0
  %1056 = vmatprep.subr.mxu0 0.0
  %1057 = vmatpush1.msra.mxu0 0.0
  %1058 = vmatprep.subr.mxu0 0.0
  %1059 = vmatpush1.msra.mxu0 0.0
  %1060 = vmatprep.subr.mxu0 0.0
  %1061 = vmatpush1.msra.mxu0 0.0
  %1062 = vmatprep.subr.mxu0 0.0
  %1063 = vmatpush1.msra.mxu0 0.0
  %1064 = vmatprep.subr.mxu0 0.0
  %1065 = vmatpush1.msra.mxu0 0.0
  %1066 = vmatprep.subr.mxu0 0.0
  %1067 = vmatpush1.msra.mxu0 0.0
  %1068 = vmatprep.subr.mxu0 0.0
  %1069 = vmatpush1.msra.mxu0 0.0
  %1070 = vmatprep.subr.mxu0 0.0
  %1071 = vmatpush1.msra.mxu0 0.0
  %1072 = vmatprep.subr.mxu0 0.0
  %1073 = vmatpush1.msra.mxu0 0.0
  %1074 = vmatprep.subr.mxu0 0.0
  %1075 = vmatpush1.msra.mxu0 0.0
  %1076 = vmatprep.subr.mxu0 0.0
  %1077 = vmatpush1.msra.mxu0 0.0
  %1078 = vmatprep.subr.mxu0 0.0
  %1079 = vmatpush1.msra.mxu0 0.0
  %1080 = vmatprep.subr.mxu0 0.0
  %1081 = vmatpush1.msra.mxu0 0.0
  %1082 = vmatprep.subr.mxu0 0.0
  %1083 = vmatpush1.msra.mxu0 0.0
  %1084 = vmatprep.subr.mxu0 0.0
  %1085 = vmatpush1.msra.mxu0 0.0
  %1086 = vmatprep.subr.mxu0 0.0
  %1087 = vmatpush1.msra.mxu0 0.0
  %1088 = vmatprep.subr.mxu0 0.0
  %1089 = vmatpush1.msra.mxu0 0.0
  %1090 = vmatprep.mubr.f32.mxu0 0.0
  %1091 = vmatmul.mubr.f32.gmra.mrb[0].mxu0 %v919
  %v1092 = vpop.f32.mrb[0].mxu0
  %v1093 = vadd.f32 %v59, %v1092
  %v1094 = vpop.f32.mrb[0].mxu0
  %1095 = vmatprep.mubr.f32.mxu0 0.0
  %1096 = vmatmul.mubr.f32.gmra.mrb[0].mxu0 %v922
  %v1097 = vpop.f32.mrb[0].mxu0
  %v1098 = vadd.f32 %v59, %v1097
  %v1099 = vpop.f32.mrb[0].mxu0
  %1100 = vmatprep.mubr.f32.mxu0 0.0
  %1101 = vmatmul.mubr.f32.gmra.mrb[0].mxu0 %v925
  %v1102 = vpop.f32.mrb[0].mxu0
  %v1103 = vadd.f32 %v59, %v1102
  %v1104 = vpop.f32.mrb[0].mxu0
  %1105 = vmatprep.mubr.f32.mxu0 0.0
  %1106 = vmatmul.mubr.f32.gmra.mrb[0].mxu0 %v928
  %v1107 = vpop.f32.mrb[0].mxu0
  %v1108 = vadd.f32 %v59, %v1107
  %v1109 = vpop.f32.mrb[0].mxu0
  %1110 = vmatprep.mubr.f32.mxu0 0.0
  %1111 = vmatmul.mubr.f32.gmra.mrb[0].mxu0 %v931
  %v1112 = vpop.f32.mrb[0].mxu0
  %v1113 = vadd.f32 %v59, %v1112
  %v1114 = vpop.f32.mrb[0].mxu0
  %1115 = vmatprep.mubr.f32.mxu0 0.0
  %1116 = vmatmul.mubr.f32.gmra.mrb[0].mxu0 %v934
  %v1117 = vpop.f32.mrb[0].mxu0
  %v1118 = vadd.f32 %v59, %v1117
  %v1119 = vpop.f32.mrb[0].mxu0
  %1120 = vmatprep.mubr.f32.mxu0 0.0
  %1121 = vmatmul.mubr.f32.gmra.mrb[0].mxu0 %v937
  %v1122 = vpop.f32.mrb[0].mxu0
  %v1123 = vadd.f32 %v59, %v1122
  %v1124 = vpop.f32.mrb[0].mxu0
  %1125 = vmatprep.mubr.f32.mxu0 0.0
  %1126 = vmatmul.mubr.f32.gmra.mrb[0].mxu0 %v940
  %v1127 = vpop.f32.mrb[0].mxu0
  %v1128 = vadd.f32 %v59, %v1127
  %v1129 = vpop.f32.mrb[0].mxu0
  %1130 = vmatprep.mubr.f32.mxu0 0.0
  %1131 = vmatmul.mubr.f32.gmra.mrb[0].mxu0 %v943
  %v1132 = vpop.f32.mrb[0].mxu0
  %v1133 = vadd.f32 %v59, %v1132
  %v1134 = vpop.f32.mrb[0].mxu0
  %1135 = vmatprep.mubr.f32.mxu0 0.0
  %1136 = vmatmul.mubr.f32.gmra.mrb[0].mxu0 %v946
  %v1137 = vpop.f32.mrb[0].mxu0
  %v1138 = vadd.f32 %v59, %v1137
  %v1139 = vpop.f32.mrb[0].mxu0
  %1140 = vmatprep.mubr.f32.mxu0 0.0
  %1141 = vmatmul.mubr.f32.gmra.mrb[0].mxu0 %v949
  %v1142 = vpop.f32.mrb[0].mxu0
  %v1143 = vadd.f32 %v59, %v1142
  %v1144 = vpop.f32.mrb[0].mxu0
  %1145 = vmatprep.mubr.f32.mxu0 0.0
  %1146 = vmatmul.mubr.f32.gmra.mrb[0].mxu0 %v952
  %v1147 = vpop.f32.mrb[0].mxu0
  %v1148 = vadd.f32 %v59, %v1147
  %v1149 = vpop.f32.mrb[0].mxu0
  %1150 = vmatprep.mubr.f32.mxu0 0.0
  %1151 = vmatmul.mubr.f32.gmra.mrb[0].mxu0 %v955
  %v1152 = vpop.f32.mrb[0].mxu0
  %v1153 = vadd.f32 %v59, %v1152
  %v1154 = vpop.f32.mrb[0].mxu0
  %1155 = vmatprep.mubr.f32.mxu0 0.0
  %1156 = vmatmul.mubr.f32.gmra.mrb[0].mxu0 %v958
  %v1157 = vpop.f32.mrb[0].mxu0
  %v1158 = vadd.f32 %v59, %v1157
  %v1159 = vpop.f32.mrb[0].mxu0
  %1160 = vmatprep.mubr.f32.mxu0 0.0
  %1161 = vmatmul.mubr.f32.gmra.mrb[0].mxu0 %v961
  %v1162 = vpop.f32.mrb[0].mxu0
  %v1163 = vadd.f32 %v59, %v1162
  %v1164 = vpop.f32.mrb[0].mxu0
  %1165 = vmatprep.mubr.f32.mxu0 0.0
  %1166 = vmatmul.mubr.f32.gmra.mrb[0].mxu0 %v964
  %v1167 = vpop.f32.mrb[0].mxu0
  %v1168 = vadd.f32 %v59, %v1167
  %v1169 = vpop.f32.mrb[0].mxu0
  %1170 = vmatprep.mubr.f32.mxu0 0.0
  %1171 = vmatmul.mubr.f32.gmra.mrb[0].mxu0 %v967
  %v1172 = vpop.f32.mrb[0].mxu0
  %v1173 = vadd.f32 %v59, %v1172
  %v1174 = vpop.f32.mrb[0].mxu0
  %1175 = vmatprep.mubr.f32.mxu0 0.0
  %1176 = vmatmul.mubr.f32.gmra.mrb[0].mxu0 %v970
  %v1177 = vpop.f32.mrb[0].mxu0
  %v1178 = vadd.f32 %v59, %v1177
  %v1179 = vpop.f32.mrb[0].mxu0
  %1180 = vmatprep.mubr.f32.mxu0 0.0
  %1181 = vmatmul.mubr.f32.gmra.mrb[0].mxu0 %v973
  %v1182 = vpop.f32.mrb[0].mxu0
  %v1183 = vadd.f32 %v59, %v1182
  %v1184 = vpop.f32.mrb[0].mxu0
  %1185 = vmatprep.mubr.f32.mxu0 0.0
  %1186 = vmatmul.mubr.f32.gmra.mrb[0].mxu0 %v976
  %v1187 = vpop.f32.mrb[0].mxu0
  %v1188 = vadd.f32 %v59, %v1187
  %v1189 = vpop.f32.mrb[0].mxu0
  %1190 = vmatprep.mubr.f32.mxu0 0.0
  %1191 = vmatmul.mubr.f32.gmra.mrb[0].mxu0 %v979
  %v1192 = vpop.f32.mrb[0].mxu0
  %v1193 = vadd.f32 %v59, %v1192
  %v1194 = vpop.f32.mrb[0].mxu0
  %1195 = vmatprep.mubr.f32.mxu0 0.0
  %1196 = vmatmul.mubr.f32.gmra.mrb[0].mxu0 %v982
  %v1197 = vpop.f32.mrb[0].mxu0
  %v1198 = vadd.f32 %v59, %v1197
  %v1199 = vpop.f32.mrb[0].mxu0
  %1200 = vmatprep.mubr.f32.mxu0 0.0
  %1201 = vmatmul.mubr.f32.gmra.mrb[0].mxu0 %v985
  %v1202 = vpop.f32.mrb[0].mxu0
  %v1203 = vadd.f32 %v59, %v1202
  %v1204 = vpop.f32.mrb[0].mxu0
  %1205 = vmatprep.mubr.f32.mxu0 0.0
  %1206 = vmatmul.mubr.f32.gmra.mrb[0].mxu0 %v988
  %v1207 = vpop.f32.mrb[0].mxu0
  %v1208 = vadd.f32 %v59, %v1207
  %v1209 = vpop.f32.mrb[0].mxu0
  %1210 = vmatprep.mubr.f32.mxu0 0.0
  %1211 = vmatmul.mubr.f32.gmra.mrb[0].mxu0 %v991
  %v1212 = vpop.f32.mrb[0].mxu0
  %v1213 = vadd.f32 %v59, %v1212
  %v1214 = vpop.f32.mrb[0].mxu0
  %1215 = vmatprep.mubr.f32.mxu0 0.0
  %1216 = vmatmul.mubr.f32.gmra.mrb[0].mxu0 %v994
  %v1217 = vpop.f32.mrb[0].mxu0
  %v1218 = vadd.f32 %v59, %v1217
  %v1219 = vpop.f32.mrb[0].mxu0
  %1220 = vmatprep.mubr.f32.mxu0 0.0
  %1221 = vmatmul.mubr.f32.gmra.mrb[0].mxu0 %v997
  %v1222 = vpop.f32.mrb[0].mxu0
  %v1223 = vadd.f32 %v59, %v1222
  %v1224 = vpop.f32.mrb[0].mxu0
  %1225 = vmatprep.mubr.f32.mxu0 0.0
  %1226 = vmatmul.mubr.f32.gmra.mrb[0].mxu0 %v1000
  %v1227 = vpop.f32.mrb[0].mxu0
  %v1228 = vadd.f32 %v59, %v1227
  %v1229 = vpop.f32.mrb[0].mxu0
  %1230 = vmatprep.mubr.f32.mxu0 0.0
  %1231 = vmatmul.mubr.f32.gmra.mrb[0].mxu0 %v1003
  %v1232 = vpop.f32.mrb[0].mxu0
  %v1233 = vadd.f32 %v59, %v1232
  %v1234 = vpop.f32.mrb[0].mxu0
  %1235 = vmatprep.mubr.f32.mxu0 0.0
  %1236 = vmatmul.mubr.f32.gmra.mrb[0].mxu0 %v1006
  %v1237 = vpop.f32.mrb[0].mxu0
  %v1238 = vadd.f32 %v59, %v1237
  %v1239 = vpop.f32.mrb[0].mxu0
  %1240 = vmatprep.mubr.f32.mxu0 0.0
  %1241 = vmatmul.mubr.f32.gmra.mrb[0].mxu0 %v1009
  %v1242 = vpop.f32.mrb[0].mxu0
  %v1243 = vadd.f32 %v59, %v1242
  %v1244 = vpop.f32.mrb[0].mxu0
  %1245 = vmatprep.mubr.f32.mxu0 0.0
  %1246 = vmatmul.mubr.f32.gmra.mrb[0].mxu0 %v1012
  %v1247 = vpop.f32.mrb[0].mxu0
  %v1248 = vadd.f32 %v59, %v1247
  %v1249 = vpop.f32.mrb[0].mxu0
  %1250 = vmatprep.mubr.f32.mxu0 0.0
  %1251 = vmatmul.mubr.f32.gmra.mrb[0].mxu0 %v1015
  %v1252 = vpop.f32.mrb[0].mxu0
  %v1253 = vadd.f32 %v59, %v1252
  %v1254 = vpop.f32.mrb[0].mxu0
  %1255 = vmatprep.mubr.f32.mxu0 0.0
  %1256 = vmatmul.mubr.f32.gmra.mrb[0].mxu0 %v1018
  %v1257 = vpop.f32.mrb[0].mxu0
  %v1258 = vadd.f32 %v59, %v1257
  %v1259 = vpop.f32.mrb[0].mxu0
  %1260 = vmatprep.mubr.f32.mxu0 0.0
  %1261 = vmatmul.mubr.f32.gmra.mrb[0].mxu0 %v1021
  %v1262 = vpop.f32.mrb[0].mxu0
  %v1263 = vadd.f32 %v59, %v1262
  %v1264 = vpop.f32.mrb[0].mxu0
  %1265 = vmatprep.mubr.f32.mxu0 0.0
  %1266 = vmatmul.mubr.f32.gmra.mrb[0].mxu0 %v1024
  %v1267 = vpop.f32.mrb[0].mxu0
  %v1268 = vadd.f32 %v59, %v1267
  %v1269 = vpop.f32.mrb[0].mxu0
  %1270 = vdwg.mxu0
  %v1271 = vtanh.pop %v1093
  %v1272 = vtanh.pop %v1098
  %v1273 = vtanh.pop %v1103
  %v1274 = vtanh.pop %v1108
  %v1275 = vtanh.pop %v1113
  %v1276 = vtanh.pop %v1118
  %v1277 = vtanh.pop %v1123
  %v1278 = vtanh.pop %v1128
  %v1279 = vtanh.pop %v1133
  %v1280 = vtanh.pop %v1138
  %v1281 = vtanh.pop %v1143
  %v1282 = vtanh.pop %v1148
  %v1283 = vtanh.pop %v1153
  %v1284 = vtanh.pop %v1158
  %v1285 = vtanh.pop %v1163
  %v1286 = vtanh.pop %v1168
  %v1287 = vtanh.pop %v1173
  %v1288 = vtanh.pop %v1178
  %v1289 = vtanh.pop %v1183
  %v1290 = vtanh.pop %v1188
  %v1291 = vtanh.pop %v1193
  %v1292 = vtanh.pop %v1198
  %v1293 = vtanh.pop %v1203
  %v1294 = vtanh.pop %v1208
  %v1295 = vtanh.pop %v1213
  %v1296 = vtanh.pop %v1218
  %v1297 = vtanh.pop %v1223
  %v1298 = vtanh.pop %v1228
  %v1299 = vtanh.pop %v1233
  %v1300 = vtanh.pop %v1238
  %v1301 = vtanh.pop %v1243
  %v1302 = vtanh.pop %v1248
  %v1303 = vtanh.pop %v1253
  %v1304 = vtanh.pop %v1258
  %v1305 = vtanh.pop %v1263
  %v1306 = vtanh.pop %v1268
  %s1307 = scalar_lea.vmem %s0, 864
  %v1308 = vld [vmem:[%s1307] sm:$0xff]
  %v1309 = vld [vmem:[%s1307 + $0x8] sm:$0xff]
  %v1310 = vld [vmem:[%s1307 + $0x10] sm:$0xff]
  %v1311 = vld [vmem:[%s1307 + $0x18] sm:$0xff]
  %v1312 = vld [vmem:[%s1307 + $0x20] sm:$0xff]
  %v1313 = vld [vmem:[%s1307 + $0x28] sm:$0xff]
  %v1314 = vld [vmem:[%s1307 + $0x30] sm:$0xff]
  %v1315 = vld [vmem:[%s1307 + $0x38] sm:$0xff]
  %v1316 = vld [vmem:[%s1307 + $0x40] sm:$0xff]
  %v1317 = vld [vmem:[%s1307 + $0x48] sm:$0xff]
  %v1318 = vld [vmem:[%s1307 + $0x50] sm:$0xff]
  %v1319 = vld [vmem:[%s1307 + $0x58] sm:$0xff]
  %v1320 = vld [vmem:[%s1307 + $0x60] sm:$0xff]
  %v1321 = vld [vmem:[%s1307 + $0x68] sm:$0xff]
  %v1322 = vld [vmem:[%s1307 + $0x70] sm:$0xff]
  %v1323 = vld [vmem:[%s1307 + $0x78] sm:$0xff]
  %v1324 = vld [vmem:[%s1307 + $0x80] sm:$0xff]
  %v1325 = vld [vmem:[%s1307 + $0x88] sm:$0xff]
  %v1326 = vld [vmem:[%s1307 + $0x90] sm:$0xff]
  %v1327 = vld [vmem:[%s1307 + $0x98] sm:$0xff]
  %v1328 = vld [vmem:[%s1307 + $0xa0] sm:$0xff]
  %v1329 = vld [vmem:[%s1307 + $0xa8] sm:$0xff]
  %v1330 = vld [vmem:[%s1307 + $0xb0] sm:$0xff]
  %v1331 = vld [vmem:[%s1307 + $0xb8] sm:$0xff]
  %v1332 = vld [vmem:[%s1307 + $0xc0] sm:$0xff]
  %v1333 = vld [vmem:[%s1307 + $0xc8] sm:$0xff]
  %v1334 = vld [vmem:[%s1307 + $0xd0] sm:$0xff]
  %v1335 = vld [vmem:[%s1307 + $0xd8] sm:$0xff]
  %v1336 = vld [vmem:[%s1307 + $0xe0] sm:$0xff]
  %v1337 = vld [vmem:[%s1307 + $0xe8] sm:$0xff]
  %v1338 = vld [vmem:[%s1307 + $0xf0] sm:$0xff]
  %v1339 = vld [vmem:[%s1307 + $0xf8] sm:$0xff]
  %v1340 = vld [vmem:[%s1307 + $0x100] sm:$0xff]
  %v1341 = vld [vmem:[%s1307 + $0x108] sm:$0xff]
  %v1342 = vld [vmem:[%s1307 + $0x110] sm:$0xff]
  %v1343 = vld [vmem:[%s1307 + $0x118] sm:$0xff]
  %v1345 = vsel %vm61, %v1308, 0
  %v1348 = vsel %vm61, %v1309, 0
  %v1351 = vsel %vm61, %v1310, 0
  %v1354 = vsel %vm61, %v1311, 0
  %v1357 = vsel %vm61, %v1312, 0
  %v1360 = vsel %vm61, %v1313, 0
  %v1363 = vsel %vm61, %v1314, 0
  %v1366 = vsel %vm61, %v1315, 0
  %v1369 = vsel %vm61, %v1316, 0
  %v1372 = vsel %vm61, %v1317, 0
  %v1375 = vsel %vm61, %v1318, 0
  %v1378 = vsel %vm61, %v1319, 0
  %v1381 = vsel %vm61, %v1320, 0
  %v1384 = vsel %vm61, %v1321, 0
  %v1387 = vsel %vm61, %v1322, 0
  %v1390 = vsel %vm61, %v1323, 0
  %v1393 = vsel %vm61, %v1324, 0
  %v1396 = vsel %vm61, %v1325, 0
  %v1399 = vsel %vm61, %v1326, 0
  %v1402 = vsel %vm61, %v1327, 0
  %v1405 = vsel %vm61, %v1328, 0
  %v1408 = vsel %vm61, %v1329, 0
  %v1411 = vsel %vm61, %v1330, 0
  %v1414 = vsel %vm61, %v1331, 0
  %v1417 = vsel %vm61, %v1332, 0
  %v1420 = vsel %vm61, %v1333, 0
  %v1423 = vsel %vm61, %v1334, 0
  %v1426 = vsel %vm61, %v1335, 0
  %v1429 = vsel %vm61, %v1336, 0
  %v1432 = vsel %vm61, %v1337, 0
  %v1435 = vsel %vm61, %v1338, 0
  %v1438 = vsel %vm61, %v1339, 0
  %v1441 = vsel %vm61, %v1340, 0
  %v1444 = vsel %vm61, %v1341, 0
  %v1447 = vsel %vm61, %v1342, 0
  %v1450 = vsel %vm61, %v1343, 0
  %1452 = vmatprep.subr.mxu0 0.0
  %1453 = vmatpush1.msra.mxu0 %v14
  %1454 = vmatprep.subr.mxu0 0.0
  %1455 = vmatpush1.msra.mxu0 %v15
  %1456 = vmatprep.subr.mxu0 0.0
  %1457 = vmatpush1.msra.mxu0 %v16
  %1458 = vmatprep.subr.mxu0 0.0
  %1459 = vmatpush1.msra.mxu0 %v172
  %1460 = vmatprep.subr.mxu0 0.0
  %1461 = vmatpush1.msra.mxu0 0.0
  %1462 = vmatprep.subr.mxu0 0.0
  %1463 = vmatpush1.msra.mxu0 0.0
  %1464 = vmatprep.subr.mxu0 0.0
  %1465 = vmatpush1.msra.mxu0 0.0
  %1466 = vmatprep.subr.mxu0 0.0
  %1467 = vmatpush1.msra.mxu0 0.0
  %1468 = vmatprep.subr.mxu0 0.0
  %1469 = vmatpush1.msra.mxu0 0.0
  %1470 = vmatprep.subr.mxu0 0.0
  %1471 = vmatpush1.msra.mxu0 0.0
  %1472 = vmatprep.subr.mxu0 0.0
  %1473 = vmatpush1.msra.mxu0 0.0
  %1474 = vmatprep.subr.mxu0 0.0
  %1475 = vmatpush1.msra.mxu0 0.0
  %1476 = vmatprep.subr.mxu0 0.0
  %1477 = vmatpush1.msra.mxu0 0.0
  %1478 = vmatprep.subr.mxu0 0.0
  %1479 = vmatpush1.msra.mxu0 0.0
  %1480 = vmatprep.subr.mxu0 0.0
  %1481 = vmatpush1.msra.mxu0 0.0
  %1482 = vmatprep.subr.mxu0 0.0
  %1483 = vmatpush1.msra.mxu0 0.0
  %1484 = vmatprep.subr.mxu0 0.0
  %1485 = vmatpush1.msra.mxu0 0.0
  %1486 = vmatprep.subr.mxu0 0.0
  %1487 = vmatpush1.msra.mxu0 0.0
  %1488 = vmatprep.subr.mxu0 0.0
  %1489 = vmatpush1.msra.mxu0 0.0
  %1490 = vmatprep.subr.mxu0 0.0
  %1491 = vmatpush1.msra.mxu0 0.0
  %1492 = vmatprep.subr.mxu0 0.0
  %1493 = vmatpush1.msra.mxu0 0.0
  %1494 = vmatprep.subr.mxu0 0.0
  %1495 = vmatpush1.msra.mxu0 0.0
  %1496 = vmatprep.subr.mxu0 0.0
  %1497 = vmatpush1.msra.mxu0 0.0
  %1498 = vmatprep.subr.mxu0 0.0
  %1499 = vmatpush1.msra.mxu0 0.0
  %1500 = vmatprep.subr.mxu0 0.0
  %1501 = vmatpush1.msra.mxu0 0.0
  %1502 = vmatprep.subr.mxu0 0.0
  %1503 = vmatpush1.msra.mxu0 0.0
  %1504 = vmatprep.subr.mxu0 0.0
  %1505 = vmatpush1.msra.mxu0 0.0
  %1506 = vmatprep.subr.mxu0 0.0
  %1507 = vmatpush1.msra.mxu0 0.0
  %1508 = vmatprep.subr.mxu0 0.0
  %1509 = vmatpush1.msra.mxu0 0.0
  %1510 = vmatprep.subr.mxu0 0.0
  %1511 = vmatpush1.msra.mxu0 0.0
  %1512 = vmatprep.subr.mxu0 0.0
  %1513 = vmatpush1.msra.mxu0 0.0
  %1514 = vmatprep.subr.mxu0 0.0
  %1515 = vmatpush1.msra.mxu0 0.0
  %1516 = vmatprep.mubr.f32.mxu0 0.0
  %1517 = vmatmul.mubr.f32.gmra.mrb[0].mxu0 %v1345
  %v1518 = vpop.f32.mrb[0].mxu0
  %v1519 = vadd.f32 %v59, %v1518
  %v1520 = vpop.f32.mrb[0].mxu0
  %1521 = vmatprep.mubr.f32.mxu0 0.0
  %1522 = vmatmul.mubr.f32.gmra.mrb[0].mxu0 %v1348
  %v1523 = vpop.f32.mrb[0].mxu0
  %v1524 = vadd.f32 %v59, %v1523
  %v1525 = vpop.f32.mrb[0].mxu0
  %1526 = vmatprep.mubr.f32.mxu0 0.0
  %1527 = vmatmul.mubr.f32.gmra.mrb[0].mxu0 %v1351
  %v1528 = vpop.f32.mrb[0].mxu0
  %v1529 = vadd.f32 %v59, %v1528
  %v1530 = vpop.f32.mrb[0].mxu0
  %1531 = vmatprep.mubr.f32.mxu0 0.0
  %1532 = vmatmul.mubr.f32.gmra.mrb[0].mxu0 %v1354
  %v1533 = vpop.f32.mrb[0].mxu0
  %v1534 = vadd.f32 %v59, %v1533
  %v1535 = vpop.f32.mrb[0].mxu0
  %1536 = vmatprep.mubr.f32.mxu0 0.0
  %1537 = vmatmul.mubr.f32.gmra.mrb[0].mxu0 %v1357
  %v1538 = vpop.f32.mrb[0].mxu0
  %v1539 = vadd.f32 %v59, %v1538
  %v1540 = vpop.f32.mrb[0].mxu0
  %1541 = vmatprep.mubr.f32.mxu0 0.0
  %1542 = vmatmul.mubr.f32.gmra.mrb[0].mxu0 %v1360
  %v1543 = vpop.f32.mrb[0].mxu0
  %v1544 = vadd.f32 %v59, %v1543
  %v1545 = vpop.f32.mrb[0].mxu0
  %1546 = vmatprep.mubr.f32.mxu0 0.0
  %1547 = vmatmul.mubr.f32.gmra.mrb[0].mxu0 %v1363
  %v1548 = vpop.f32.mrb[0].mxu0
  %v1549 = vadd.f32 %v59, %v1548
  %v1550 = vpop.f32.mrb[0].mxu0
  %1551 = vmatprep.mubr.f32.mxu0 0.0
  %1552 = vmatmul.mubr.f32.gmra.mrb[0].mxu0 %v1366
  %v1553 = vpop.f32.mrb[0].mxu0
  %v1554 = vadd.f32 %v59, %v1553
  %v1555 = vpop.f32.mrb[0].mxu0
  %1556 = vmatprep.mubr.f32.mxu0 0.0
  %1557 = vmatmul.mubr.f32.gmra.mrb[0].mxu0 %v1369
  %v1558 = vpop.f32.mrb[0].mxu0
  %v1559 = vadd.f32 %v59, %v1558
  %v1560 = vpop.f32.mrb[0].mxu0
  %1561 = vmatprep.mubr.f32.mxu0 0.0
  %1562 = vmatmul.mubr.f32.gmra.mrb[0].mxu0 %v1372
  %v1563 = vpop.f32.mrb[0].mxu0
  %v1564 = vadd.f32 %v59, %v1563
  %v1565 = vpop.f32.mrb[0].mxu0
  %1566 = vmatprep.mubr.f32.mxu0 0.0
  %1567 = vmatmul.mubr.f32.gmra.mrb[0].mxu0 %v1375
  %v1568 = vpop.f32.mrb[0].mxu0
  %v1569 = vadd.f32 %v59, %v1568
  %v1570 = vpop.f32.mrb[0].mxu0
  %1571 = vmatprep.mubr.f32.mxu0 0.0
  %1572 = vmatmul.mubr.f32.gmra.mrb[0].mxu0 %v1378
  %v1573 = vpop.f32.mrb[0].mxu0
  %v1574 = vadd.f32 %v59, %v1573
  %v1575 = vpop.f32.mrb[0].mxu0
  %1576 = vmatprep.mubr.f32.mxu0 0.0
  %1577 = vmatmul.mubr.f32.gmra.mrb[0].mxu0 %v1381
  %v1578 = vpop.f32.mrb[0].mxu0
  %v1579 = vadd.f32 %v59, %v1578
  %v1580 = vpop.f32.mrb[0].mxu0
  %1581 = vmatprep.mubr.f32.mxu0 0.0
  %1582 = vmatmul.mubr.f32.gmra.mrb[0].mxu0 %v1384
  %v1583 = vpop.f32.mrb[0].mxu0
  %v1584 = vadd.f32 %v59, %v1583
  %v1585 = vpop.f32.mrb[0].mxu0
  %1586 = vmatprep.mubr.f32.mxu0 0.0
  %1587 = vmatmul.mubr.f32.gmra.mrb[0].mxu0 %v1387
  %v1588 = vpop.f32.mrb[0].mxu0
  %v1589 = vadd.f32 %v59, %v1588
  %v1590 = vpop.f32.mrb[0].mxu0
  %1591 = vmatprep.mubr.f32.mxu0 0.0
  %1592 = vmatmul.mubr.f32.gmra.mrb[0].mxu0 %v1390
  %v1593 = vpop.f32.mrb[0].mxu0
  %v1594 = vadd.f32 %v59, %v1593
  %v1595 = vpop.f32.mrb[0].mxu0
  %1596 = vmatprep.mubr.f32.mxu0 0.0
  %1597 = vmatmul.mubr.f32.gmra.mrb[0].mxu0 %v1393
  %v1598 = vpop.f32.mrb[0].mxu0
  %v1599 = vadd.f32 %v59, %v1598
  %v1600 = vpop.f32.mrb[0].mxu0
  %1601 = vmatprep.mubr.f32.mxu0 0.0
  %1602 = vmatmul.mubr.f32.gmra.mrb[0].mxu0 %v1396
  %v1603 = vpop.f32.mrb[0].mxu0
  %v1604 = vadd.f32 %v59, %v1603
  %v1605 = vpop.f32.mrb[0].mxu0
  %1606 = vmatprep.mubr.f32.mxu0 0.0
  %1607 = vmatmul.mubr.f32.gmra.mrb[0].mxu0 %v1399
  %v1608 = vpop.f32.mrb[0].mxu0
  %v1609 = vadd.f32 %v59, %v1608
  %v1610 = vpop.f32.mrb[0].mxu0
  %1611 = vmatprep.mubr.f32.mxu0 0.0
  %1612 = vmatmul.mubr.f32.gmra.mrb[0].mxu0 %v1402
  %v1613 = vpop.f32.mrb[0].mxu0
  %v1614 = vadd.f32 %v59, %v1613
  %v1615 = vpop.f32.mrb[0].mxu0
  %1616 = vmatprep.mubr.f32.mxu0 0.0
  %1617 = vmatmul.mubr.f32.gmra.mrb[0].mxu0 %v1405
  %v1618 = vpop.f32.mrb[0].mxu0
  %v1619 = vadd.f32 %v59, %v1618
  %v1620 = vpop.f32.mrb[0].mxu0
  %1621 = vmatprep.mubr.f32.mxu0 0.0
  %1622 = vmatmul.mubr.f32.gmra.mrb[0].mxu0 %v1408
  %v1623 = vpop.f32.mrb[0].mxu0
  %v1624 = vadd.f32 %v59, %v1623
  %v1625 = vpop.f32.mrb[0].mxu0
  %1626 = vmatprep.mubr.f32.mxu0 0.0
  %1627 = vmatmul.mubr.f32.gmra.mrb[0].mxu0 %v1411
  %v1628 = vpop.f32.mrb[0].mxu0
  %v1629 = vadd.f32 %v59, %v1628
  %v1630 = vpop.f32.mrb[0].mxu0
  %1631 = vmatprep.mubr.f32.mxu0 0.0
  %1632 = vmatmul.mubr.f32.gmra.mrb[0].mxu0 %v1414
  %v1633 = vpop.f32.mrb[0].mxu0
  %v1634 = vadd.f32 %v59, %v1633
  %v1635 = vpop.f32.mrb[0].mxu0
  %1636 = vmatprep.mubr.f32.mxu0 0.0
  %1637 = vmatmul.mubr.f32.gmra.mrb[0].mxu0 %v1417
  %v1638 = vpop.f32.mrb[0].mxu0
  %v1639 = vadd.f32 %v59, %v1638
  %v1640 = vpop.f32.mrb[0].mxu0
  %1641 = vmatprep.mubr.f32.mxu0 0.0
  %1642 = vmatmul.mubr.f32.gmra.mrb[0].mxu0 %v1420
  %v1643 = vpop.f32.mrb[0].mxu0
  %v1644 = vadd.f32 %v59, %v1643
  %v1645 = vpop.f32.mrb[0].mxu0
  %1646 = vmatprep.mubr.f32.mxu0 0.0
  %1647 = vmatmul.mubr.f32.gmra.mrb[0].mxu0 %v1423
  %v1648 = vpop.f32.mrb[0].mxu0
  %v1649 = vadd.f32 %v59, %v1648
  %v1650 = vpop.f32.mrb[0].mxu0
  %1651 = vmatprep.mubr.f32.mxu0 0.0
  %1652 = vmatmul.mubr.f32.gmra.mrb[0].mxu0 %v1426
  %v1653 = vpop.f32.mrb[0].mxu0
  %v1654 = vadd.f32 %v59, %v1653
  %v1655 = vpop.f32.mrb[0].mxu0
  %1656 = vmatprep.mubr.f32.mxu0 0.0
  %1657 = vmatmul.mubr.f32.gmra.mrb[0].mxu0 %v1429
  %v1658 = vpop.f32.mrb[0].mxu0
  %v1659 = vadd.f32 %v59, %v1658
  %v1660 = vpop.f32.mrb[0].mxu0
  %1661 = vmatprep.mubr.f32.mxu0 0.0
  %1662 = vmatmul.mubr.f32.gmra.mrb[0].mxu0 %v1432
  %v1663 = vpop.f32.mrb[0].mxu0
  %v1664 = vadd.f32 %v59, %v1663
  %v1665 = vpop.f32.mrb[0].mxu0
  %1666 = vmatprep.mubr.f32.mxu0 0.0
  %1667 = vmatmul.mubr.f32.gmra.mrb[0].mxu0 %v1435
  %v1668 = vpop.f32.mrb[0].mxu0
  %v1669 = vadd.f32 %v59, %v1668
  %v1670 = vpop.f32.mrb[0].mxu0
  %1671 = vmatprep.mubr.f32.mxu0 0.0
  %1672 = vmatmul.mubr.f32.gmra.mrb[0].mxu0 %v1438
  %v1673 = vpop.f32.mrb[0].mxu0
  %v1674 = vadd.f32 %v59, %v1673
  %v1675 = vpop.f32.mrb[0].mxu0
  %1676 = vmatprep.mubr.f32.mxu0 0.0
  %1677 = vmatmul.mubr.f32.gmra.mrb[0].mxu0 %v1441
  %v1678 = vpop.f32.mrb[0].mxu0
  %v1679 = vadd.f32 %v59, %v1678
  %v1680 = vpop.f32.mrb[0].mxu0
  %1681 = vmatprep.mubr.f32.mxu0 0.0
  %1682 = vmatmul.mubr.f32.gmra.mrb[0].mxu0 %v1444
  %v1683 = vpop.f32.mrb[0].mxu0
  %v1684 = vadd.f32 %v59, %v1683
  %v1685 = vpop.f32.mrb[0].mxu0
  %1686 = vmatprep.mubr.f32.mxu0 0.0
  %1687 = vmatmul.mubr.f32.gmra.mrb[0].mxu0 %v1447
  %v1688 = vpop.f32.mrb[0].mxu0
  %v1689 = vadd.f32 %v59, %v1688
  %v1690 = vpop.f32.mrb[0].mxu0
  %1691 = vmatprep.mubr.f32.mxu0 0.0
  %1692 = vmatmul.mubr.f32.gmra.mrb[0].mxu0 %v1450
  %v1693 = vpop.f32.mrb[0].mxu0
  %v1694 = vadd.f32 %v59, %v1693
  %v1695 = vpop.f32.mrb[0].mxu0
  %1696 = vdwg.mxu0
  %v1697 = vtanh.pop %v1519
  %v1698 = vtanh.pop %v1524
  %v1699 = vtanh.pop %v1529
  %v1700 = vtanh.pop %v1534
  %v1701 = vtanh.pop %v1539
  %v1702 = vtanh.pop %v1544
  %v1703 = vtanh.pop %v1549
  %v1704 = vtanh.pop %v1554
  %v1705 = vtanh.pop %v1559
  %v1706 = vtanh.pop %v1564
  %v1707 = vtanh.pop %v1569
  %v1708 = vtanh.pop %v1574
  %v1709 = vtanh.pop %v1579
  %v1710 = vtanh.pop %v1584
  %v1711 = vtanh.pop %v1589
  %v1712 = vtanh.pop %v1594
  %v1713 = vtanh.pop %v1599
  %v1714 = vtanh.pop %v1604
  %v1715 = vtanh.pop %v1609
  %v1716 = vtanh.pop %v1614
  %v1717 = vtanh.pop %v1619
  %v1718 = vtanh.pop %v1624
  %v1719 = vtanh.pop %v1629
  %v1720 = vtanh.pop %v1634
  %v1721 = vtanh.pop %v1639
  %v1722 = vtanh.pop %v1644
  %v1723 = vtanh.pop %v1649
  %v1724 = vtanh.pop %v1654
  %v1725 = vtanh.pop %v1659
  %v1726 = vtanh.pop %v1664
  %v1727 = vtanh.pop %v1669
  %v1728 = vtanh.pop %v1674
  %v1729 = vtanh.pop %v1679
  %v1730 = vtanh.pop %v1684
  %v1731 = vtanh.pop %v1689
  %v1732 = vtanh.pop %v1694
  %v1733 = vadd.f32 %v419, %v845
  %v1734 = vadd.f32 %v420, %v846
  %v1735 = vadd.f32 %v421, %v847
  %v1736 = vadd.f32 %v422, %v848
  %v1737 = vadd.f32 %v423, %v849
  %v1738 = vadd.f32 %v424, %v850
  %v1739 = vadd.f32 %v425, %v851
  %v1740 = vadd.f32 %v426, %v852
  %v1741 = vadd.f32 %v427, %v853
  %v1742 = vadd.f32 %v428, %v854
  %v1743 = vadd.f32 %v429, %v855
  %v1744 = vadd.f32 %v430, %v856
  %v1745 = vadd.f32 %v431, %v857
  %v1746 = vadd.f32 %v432, %v858
  %v1747 = vadd.f32 %v433, %v859
  %v1748 = vadd.f32 %v434, %v860
  %v1749 = vadd.f32 %v435, %v861
  %v1750 = vadd.f32 %v436, %v862
  %v1751 = vadd.f32 %v437, %v863
  %v1752 = vadd.f32 %v438, %v864
  %v1753 = vadd.f32 %v439, %v865
  %v1754 = vadd.f32 %v440, %v866
  %v1755 = vadd.f32 %v441, %v867
  %v1756 = vadd.f32 %v442, %v868
  %v1757 = vadd.f32 %v443, %v869
  %v1758 = vadd.f32 %v444, %v870
  %v1759 = vadd.f32 %v445, %v871
  %v1760 = vadd.f32 %v446, %v872
  %v1761 = vadd.f32 %v447, %v873
  %v1762 = vadd.f32 %v448, %v874
  %v1763 = vadd.f32 %v449, %v875
  %v1764 = vadd.f32 %v450, %v876
  %v1765 = vadd.f32 %v451, %v877
  %v1766 = vadd.f32 %v452, %v878
  %v1767 = vadd.f32 %v453, %v879
  %v1768 = vadd.f32 %v454, %v880
  %v1769 = vadd.f32 %v1733, %v1271
  %v1770 = vadd.f32 %v1734, %v1272
  %v1771 = vadd.f32 %v1735, %v1273
  %v1772 = vadd.f32 %v1736, %v1274
  %v1773 = vadd.f32 %v1737, %v1275
  %v1774 = vadd.f32 %v1738, %v1276
  %v1775 = vadd.f32 %v1739, %v1277
  %v1776 = vadd.f32 %v1740, %v1278
  %v1777 = vadd.f32 %v1741, %v1279
  %v1778 = vadd.f32 %v1742, %v1280
  %v1779 = vadd.f32 %v1743, %v1281
  %v1780 = vadd.f32 %v1744, %v1282
  %v1781 = vadd.f32 %v1745, %v1283
  %v1782 = vadd.f32 %v1746, %v1284
  %v1783 = vadd.f32 %v1747, %v1285
  %v1784 = vadd.f32 %v1748, %v1286
  %v1785 = vadd.f32 %v1749, %v1287
  %v1786 = vadd.f32 %v1750, %v1288
  %v1787 = vadd.f32 %v1751, %v1289
  %v1788 = vadd.f32 %v1752, %v1290
  %v1789 = vadd.f32 %v1753, %v1291
  %v1790 = vadd.f32 %v1754, %v1292
  %v1791 = vadd.f32 %v1755, %v1293
  %v1792 = vadd.f32 %v1756, %v1294
  %v1793 = vadd.f32 %v1757, %v1295
  %v1794 = vadd.f32 %v1758, %v1296
  %v1795 = vadd.f32 %v1759, %v1297
  %v1796 = vadd.f32 %v1760, %v1298
  %v1797 = vadd.f32 %v1761, %v1299
  %v1798 = vadd.f32 %v1762, %v1300
  %v1799 = vadd.f32 %v1763, %v1301
  %v1800 = vadd.f32 %v1764, %v1302
  %v1801 = vadd.f32 %v1765, %v1303
  %v1802 = vadd.f32 %v1766, %v1304
  %v1803 = vadd.f32 %v1767, %v1305
  %v1804 = vadd.f32 %v1768, %v1306
  %v1805 = vadd.f32 %v1769, %v1697
  %v1806 = vadd.f32 %v1770, %v1698
  %v1807 = vadd.f32 %v1771, %v1699
  %v1808 = vadd.f32 %v1772, %v1700
  %v1809 = vadd.f32 %v1773, %v1701
  %v1810 = vadd.f32 %v1774, %v1702
  %v1811 = vadd.f32 %v1775, %v1703
  %v1812 = vadd.f32 %v1776, %v1704
  %v1813 = vadd.f32 %v1777, %v1705
  %v1814 = vadd.f32 %v1778, %v1706
  %v1815 = vadd.f32 %v1779, %v1707
  %v1816 = vadd.f32 %v1780, %v1708
  %v1817 = vadd.f32 %v1781, %v1709
  %v1818 = vadd.f32 %v1782, %v1710
  %v1819 = vadd.f32 %v1783, %v1711
  %v1820 = vadd.f32 %v1784, %v1712
  %v1821 = vadd.f32 %v1785, %v1713
  %v1822 = vadd.f32 %v1786, %v1714
  %v1823 = vadd.f32 %v1787, %v1715
  %v1824 = vadd.f32 %v1788, %v1716
  %v1825 = vadd.f32 %v1789, %v1717
  %v1826 = vadd.f32 %v1790, %v1718
  %v1827 = vadd.f32 %v1791, %v1719
  %v1828 = vadd.f32 %v1792, %v1720
  %v1829 = vadd.f32 %v1793, %v1721
  %v1830 = vadd.f32 %v1794, %v1722
  %v1831 = vadd.f32 %v1795, %v1723
  %v1832 = vadd.f32 %v1796, %v1724
  %v1833 = vadd.f32 %v1797, %v1725
  %v1834 = vadd.f32 %v1798, %v1726
  %v1835 = vadd.f32 %v1799, %v1727
  %v1836 = vadd.f32 %v1800, %v1728
  %v1837 = vadd.f32 %v1801, %v1729
  %v1838 = vadd.f32 %v1802, %v1730
  %v1839 = vadd.f32 %v1803, %v1731
  %v1840 = vadd.f32 %v1804, %v1732
  %v1841 = vmul.f32 %v1805, 0.25
  %v1842 = vmul.f32 %v1806, 0.25
  %v1843 = vmul.f32 %v1807, 0.25
  %v1844 = vmul.f32 %v1808, 0.25
  %v1845 = vmul.f32 %v1809, 0.25
  %v1846 = vmul.f32 %v1810, 0.25
  %v1847 = vmul.f32 %v1811, 0.25
  %v1848 = vmul.f32 %v1812, 0.25
  %v1849 = vmul.f32 %v1813, 0.25
  %v1850 = vmul.f32 %v1814, 0.25
  %v1851 = vmul.f32 %v1815, 0.25
  %v1852 = vmul.f32 %v1816, 0.25
  %v1853 = vmul.f32 %v1817, 0.25
  %v1854 = vmul.f32 %v1818, 0.25
  %v1855 = vmul.f32 %v1819, 0.25
  %v1856 = vmul.f32 %v1820, 0.25
  %v1857 = vmul.f32 %v1821, 0.25
  %v1858 = vmul.f32 %v1822, 0.25
  %v1859 = vmul.f32 %v1823, 0.25
  %v1860 = vmul.f32 %v1824, 0.25
  %v1861 = vmul.f32 %v1825, 0.25
  %v1862 = vmul.f32 %v1826, 0.25
  %v1863 = vmul.f32 %v1827, 0.25
  %v1864 = vmul.f32 %v1828, 0.25
  %v1865 = vmul.f32 %v1829, 0.25
  %v1866 = vmul.f32 %v1830, 0.25
  %v1867 = vmul.f32 %v1831, 0.25
  %v1868 = vmul.f32 %v1832, 0.25
  %v1869 = vmul.f32 %v1833, 0.25
  %v1870 = vmul.f32 %v1834, 0.25
  %v1871 = vmul.f32 %v1835, 0.25
  %v1872 = vmul.f32 %v1836, 0.25
  %v1873 = vmul.f32 %v1837, 0.25
  %v1874 = vmul.f32 %v1838, 0.25
  %v1875 = vmul.f32 %v1839, 0.25
  %v1876 = vmul.f32 %v1840, 0.25
  %1877 = vst [vmem:[%s3] sm:$0xff] %v1841
  %1878 = vst [vmem:[%s3 + $0x8] sm:$0xff] %v1842
  %1879 = vst [vmem:[%s3 + $0x10] sm:$0xff] %v1843
  %1880 = vst [vmem:[%s3 + $0x18] sm:$0xff] %v1844
  %1881 = vst [vmem:[%s3 + $0x20] sm:$0xff] %v1845
  %1882 = vst [vmem:[%s3 + $0x28] sm:$0xff] %v1846
  %1883 = vst [vmem:[%s3 + $0x30] sm:$0xff] %v1847
  %1884 = vst [vmem:[%s3 + $0x38] sm:$0xff] %v1848
  %1885 = vst [vmem:[%s3 + $0x40] sm:$0xff] %v1849
  %1886 = vst [vmem:[%s3 + $0x48] sm:$0xff] %v1850
  %1887 = vst [vmem:[%s3 + $0x50] sm:$0xff] %v1851
  %1888 = vst [vmem:[%s3 + $0x58] sm:$0xff] %v1852
  %1889 = vst [vmem:[%s3 + $0x60] sm:$0xff] %v1853
  %1890 = vst [vmem:[%s3 + $0x68] sm:$0xff] %v1854
  %1891 = vst [vmem:[%s3 + $0x70] sm:$0xff] %v1855
  %1892 = vst [vmem:[%s3 + $0x78] sm:$0xff] %v1856
  %1893 = vst [vmem:[%s3 + $0x80] sm:$0xff] %v1857
  %1894 = vst [vmem:[%s3 + $0x88] sm:$0xff] %v1858
  %1895 = vst [vmem:[%s3 + $0x90] sm:$0xff] %v1859
  %1896 = vst [vmem:[%s3 + $0x98] sm:$0xff] %v1860
  %1897 = vst [vmem:[%s3 + $0xa0] sm:$0xff] %v1861
  %1898 = vst [vmem:[%s3 + $0xa8] sm:$0xff] %v1862
  %1899 = vst [vmem:[%s3 + $0xb0] sm:$0xff] %v1863
  %1900 = vst [vmem:[%s3 + $0xb8] sm:$0xff] %v1864
  %1901 = vst [vmem:[%s3 + $0xc0] sm:$0xff] %v1865
  %1902 = vst [vmem:[%s3 + $0xc8] sm:$0xff] %v1866
  %1903 = vst [vmem:[%s3 + $0xd0] sm:$0xff] %v1867
  %1904 = vst [vmem:[%s3 + $0xd8] sm:$0xff] %v1868
  %1905 = vst [vmem:[%s3 + $0xe0] sm:$0xff] %v1869
  %1906 = vst [vmem:[%s3 + $0xe8] sm:$0xff] %v1870
  %1907 = vst [vmem:[%s3 + $0xf0] sm:$0xff] %v1871
  %1908 = vst [vmem:[%s3 + $0xf8] sm:$0xff] %v1872
  %1909 = vst [vmem:[%s3 + $0x100] sm:$0xff] %v1873
  %1910 = vst [vmem:[%s3 + $0x108] sm:$0xff] %v1874
  %1911 = vst [vmem:[%s3 + $0x110] sm:$0xff] %v1875
  %1912 = vst [vmem:[%s3 + $0x118] sm:$0xff] %v1876
  // Predicated region
  $region14: #{lenet_forward.3} parent=0 // pred_check
    _
  $region15: #{lenet_forward.3} parent=0 // pred_check_branch
    %1914 = sbr.rel (0) target = $region17
  $region16: #{lenet_forward.3} parent=0 // pred_region
    _
  $region17: #{lenet_forward.3} parent=0 // pred_fallthru
    _
  // Predicated region
  $region18: #{lenet_forward.3} parent=0 // pred_check
    _
  $region19: #{lenet_forward.3} parent=0 // pred_check_branch
    %1916 = sbr.rel (0) target = $region21
  $region20: #{lenet_forward.3} parent=0 // pred_region
    _
  $region21: #{lenet_forward.3} parent=0 // pred_fallthru
    _

// kernel: lenet_forward.4
$region0: #{lenet_forward.4}
  #allocation0 [shape = 'u32[]', space=smem, size = 0x4, offset = 0x4, fixed_abs, tag = 'smem constant byte address 0x4 - core index']
  #allocation1 [shape = 'u32[144,128]{1,0:T(1,128)}', space=vmem, size = 0x12000, scoped, tag = 'internal scratch']
  %s0 = inlined_call_operand.vmem [shape: f32[4,32,150], index: 0, kind: input, shape index: {}]
  %s1 = inlined_call_operand.vmem [shape: f32[150,128], index: 1, kind: input, shape index: {}]
  %s2 = inlined_call_operand.vmem [shape: f32[1,128], index: 2, kind: input, shape index: {}]
  %s3 = inlined_call_operand.vmem [shape: f32[32,128], index: 3, kind: output, shape index: {}]
  %s4 = sld [smem:[#allocation0]]
  $region22: #{lenet_forward.4} parent=0
    _
  %s6 = ssub.s32 1, %s4
  %s7 = scalar_select 0, %s6, %s4
  // Predicated region
  $region2: #{lenet_forward.4} parent=0 // pred_check
    _
  $region3: #{lenet_forward.4} parent=0 // pred_check_branch
    %9 = sbr.rel (0) target = $region5
  $region4: #{lenet_forward.4} parent=0 // pred_region
    _
  $region5: #{lenet_forward.4} parent=0 // pred_fallthru
    _
  // Predicated region
  $region6: #{lenet_forward.4} parent=0 // pred_check
    _
  $region7: #{lenet_forward.4} parent=0 // pred_check_branch
    %11 = sbr.rel (0) target = $region9
  $region8: #{lenet_forward.4} parent=0 // pred_region
    _
  $region9: #{lenet_forward.4} parent=0 // pred_fallthru
    _
  // Predicated region
  $region10: #{lenet_forward.4} parent=0 // pred_check
    _
  $region11: #{lenet_forward.4} parent=0 // pred_check_branch
    %13 = sbr.rel (0) target = $region13
  $region12: #{lenet_forward.4} parent=0 // pred_region
    _
  $region13: #{lenet_forward.4} parent=0 // pred_fallthru
    _
  %v14 = vld [vmem:[%s1] sm:$0xff]
  %v15 = vld [vmem:[%s1 + $0x8] sm:$0xff]
  %v16 = vld [vmem:[%s1 + $0x10] sm:$0xff]
  %v17 = vld [vmem:[%s1 + $0x18] sm:$0xff]
  %v18 = vld [vmem:[%s1 + $0x20] sm:$0xff]
  %v19 = vld [vmem:[%s1 + $0x28] sm:$0xff]
  %v20 = vld [vmem:[%s1 + $0x30] sm:$0xff]
  %v21 = vld [vmem:[%s1 + $0x38] sm:$0xff]
  %v22 = vld [vmem:[%s1 + $0x40] sm:$0xff]
  %v23 = vld [vmem:[%s1 + $0x48] sm:$0xff]
  %v24 = vld [vmem:[%s1 + $0x50] sm:$0xff]
  %v25 = vld [vmem:[%s1 + $0x58] sm:$0xff]
  %v26 = vld [vmem:[%s1 + $0x60] sm:$0xff]
  %v27 = vld [vmem:[%s1 + $0x68] sm:$0xff]
  %v28 = vld [vmem:[%s1 + $0x70] sm:$0xff]
  %v29 = vld [vmem:[%s1 + $0x78] sm:$0xff]
  %v30 = vld [vmem:[%s1 + $0x80] sm:$0xff]
  %v31 = vld [vmem:[%s1 + $0x88] sm:$0xff]
  %v32 = vld [vmem:[%s1 + $0x90] sm:$0x3f]
  %v33 = vld [vmem:[%s2] sm:$0x1]
  %v34 = vld [vmem:[%s0] sm:$0xff]
  %v35 = vld [vmem:[%s0 + $0x8] sm:$0xff]
  %v36 = vld [vmem:[%s0 + $0x10] sm:$0xff]
  %v37 = vld [vmem:[%s0 + $0x18] sm:$0xff]
  %v38 = vld [vmem:[%s0 + $0x20] sm:$0xff]
  %v39 = vld [vmem:[%s0 + $0x28] sm:$0xff]
  %v40 = vld [vmem:[%s0 + $0x30] sm:$0xff]
  %v41 = vld [vmem:[%s0 + $0x38] sm:$0xff]
  %v43 = vlaneseq
  %v44 = vshrl.u32 %v43, 7
  %v45 = vsub.s32 0, %v44
  %v46 = vrot.slane %v33, %v45
  %vm48 = vcmask 179200
  %v50 = vsel %vm48, %v35, 0
  %v53 = vsel %vm48, %v37, 0
  %v56 = vsel %vm48, %v39, 0
  %v59 = vsel %vm48, %v41, 0
  %vm61 = vcmask 1045504
  %v63 = vsel %vm61, %v32, 0
  %65 = vmatprep.subr.mxu0 0.0
  %66 = vmatpush1.msra.mxu0 %v14
  %67 = vmatprep.subr.mxu0 0.0
  %68 = vmatpush1.msra.mxu0 %v15
  %69 = vmatprep.subr.mxu0 0.0
  %70 = vmatpush1.msra.mxu0 %v16
  %71 = vmatprep.subr.mxu0 0.0
  %72 = vmatpush1.msra.mxu0 %v17
  %73 = vmatprep.subr.mxu0 0.0
  %74 = vmatpush1.msra.mxu0 %v18
  %75 = vmatprep.subr.mxu0 0.0
  %76 = vmatpush1.msra.mxu0 %v19
  %77 = vmatprep.subr.mxu0 0.0
  %78 = vmatpush1.msra.mxu0 %v20
  %79 = vmatprep.subr.mxu0 0.0
  %80 = vmatpush1.msra.mxu0 %v21
  %81 = vmatprep.subr.mxu0 0.0
  %82 = vmatpush1.msra.mxu0 %v22
  %83 = vmatprep.subr.mxu0 0.0
  %84 = vmatpush1.msra.mxu0 %v23
  %85 = vmatprep.subr.mxu0 0.0
  %86 = vmatpush1.msra.mxu0 %v24
  %87 = vmatprep.subr.mxu0 0.0
  %88 = vmatpush1.msra.mxu0 %v25
  %89 = vmatprep.subr.mxu0 0.0
  %90 = vmatpush1.msra.mxu0 %v26
  %91 = vmatprep.subr.mxu0 0.0
  %92 = vmatpush1.msra.mxu0 %v27
  %93 = vmatprep.subr.mxu0 0.0
  %94 = vmatpush1.msra.mxu0 %v28
  %95 = vmatprep.subr.mxu0 0.0
  %96 = vmatpush1.msra.mxu0 %v29
  %97 = vmatprep.subr.mxu0 0.0
  %98 = vmatpush1.msra.mxu0 %v30
  %99 = vmatprep.subr.mxu0 0.0
  %100 = vmatpush1.msra.mxu0 %v31
  %101 = vmatprep.subr.mxu0 0.0
  %102 = vmatpush1.msra.mxu0 %v63
  %103 = vmatprep.subr.mxu0 0.0
  %104 = vmatpush1.msra.mxu0 0.0
  %105 = vmatprep.subr.mxu0 0.0
  %106 = vmatpush1.msra.mxu0 0.0
  %107 = vmatprep.subr.mxu0 0.0
  %108 = vmatpush1.msra.mxu0 0.0
  %109 = vmatprep.subr.mxu0 0.0
  %110 = vmatpush1.msra.mxu0 0.0
  %111 = vmatprep.subr.mxu0 0.0
  %112 = vmatpush1.msra.mxu0 0.0
  %113 = vmatprep.subr.mxu0 0.0
  %114 = vmatpush1.msra.mxu0 0.0
  %115 = vmatprep.subr.mxu0 0.0
  %116 = vmatpush1.msra.mxu0 0.0
  %117 = vmatprep.subr.mxu0 0.0
  %118 = vmatpush1.msra.mxu0 0.0
  %119 = vmatprep.subr.mxu0 0.0
  %120 = vmatpush1.msra.mxu0 0.0
  %121 = vmatprep.subr.mxu0 0.0
  %122 = vmatpush1.msra.mxu0 0.0
  %123 = vmatprep.subr.mxu0 0.0
  %124 = vmatpush1.msra.mxu0 0.0
  %125 = vmatprep.subr.mxu0 0.0
  %126 = vmatpush1.msra.mxu0 0.0
  %127 = vmatprep.subr.mxu0 0.0
  %128 = vmatpush1.msra.mxu0 0.0
  %129 = vmatprep.mubr.f32.mxu0 %v50
  %130 = vmatmul.mubr.f32.gmra.mrb[0].mxu0 %v34
  %v131 = vpop.f32.mrb[0].mxu0
  %v132 = vadd.f32 %v46, %v131
  %v133 = vpop.f32.mrb[0].mxu0
  %134 = vmatprep.mubr.f32.mxu0 %v53
  %135 = vmatmul.mubr.f32.gmra.mrb[0].mxu0 %v36
  %v136 = vpop.f32.mrb[0].mxu0
  %v137 = vadd.f32 %v46, %v136
  %v138 = vpop.f32.mrb[0].mxu0
  %139 = vmatprep.mubr.f32.mxu0 %v56
  %140 = vmatmul.mubr.f32.gmra.mrb[0].mxu0 %v38
  %v141 = vpop.f32.mrb[0].mxu0
  %v142 = vadd.f32 %v46, %v141
  %v143 = vpop.f32.mrb[0].mxu0
  %144 = vmatprep.mubr.f32.mxu0 %v59
  %145 = vmatmul.mubr.f32.gmra.mrb[0].mxu0 %v40
  %v146 = vpop.f32.mrb[0].mxu0
  %v147 = vadd.f32 %v46, %v146
  %v148 = vpop.f32.mrb[0].mxu0
  %149 = vdwg.mxu0
  %v150 = vtanh.pop %v132
  %v151 = vtanh.pop %v137
  %v152 = vtanh.pop %v142
  %v153 = vtanh.pop %v147
  %s154 = scalar_lea.vmem %s0, 64
  %v155 = vld [vmem:[%s154] sm:$0xff]
  %v156 = vld [vmem:[%s154 + $0x8] sm:$0xff]
  %v157 = vld [vmem:[%s154 + $0x10] sm:$0xff]
  %v158 = vld [vmem:[%s154 + $0x18] sm:$0xff]
  %v159 = vld [vmem:[%s154 + $0x20] sm:$0xff]
  %v160 = vld [vmem:[%s154 + $0x28] sm:$0xff]
  %v161 = vld [vmem:[%s154 + $0x30] sm:$0xff]
  %v162 = vld [vmem:[%s154 + $0x38] sm:$0xff]
  %v164 = vsel %vm48, %v156, 0
  %v167 = vsel %vm48, %v158, 0
  %v170 = vsel %vm48, %v160, 0
  %v173 = vsel %vm48, %v162, 0
  %175 = vmatprep.subr.mxu0 0.0
  %176 = vmatpush1.msra.mxu0 %v14
  %177 = vmatprep.subr.mxu0 0.0
  %178 = vmatpush1.msra.mxu0 %v15
  %179 = vmatprep.subr.mxu0 0.0
  %180 = vmatpush1.msra.mxu0 %v16
  %181 = vmatprep.subr.mxu0 0.0
  %182 = vmatpush1.msra.mxu0 %v17
  %183 = vmatprep.subr.mxu0 0.0
  %184 = vmatpush1.msra.mxu0 %v18
  %185 = vmatprep.subr.mxu0 0.0
  %186 = vmatpush1.msra.mxu0 %v19
  %187 = vmatprep.subr.mxu0 0.0
  %188 = vmatpush1.msra.mxu0 %v20
  %189 = vmatprep.subr.mxu0 0.0
  %190 = vmatpush1.msra.mxu0 %v21
  %191 = vmatprep.subr.mxu0 0.0
  %192 = vmatpush1.msra.mxu0 %v22
  %193 = vmatprep.subr.mxu0 0.0
  %194 = vmatpush1.msra.mxu0 %v23
  %195 = vmatprep.subr.mxu0 0.0
  %196 = vmatpush1.msra.mxu0 %v24
  %197 = vmatprep.subr.mxu0 0.0
  %198 = vmatpush1.msra.mxu0 %v25
  %199 = vmatprep.subr.mxu0 0.0
  %200 = vmatpush1.msra.mxu0 %v26
  %201 = vmatprep.subr.mxu0 0.0
  %202 = vmatpush1.msra.mxu0 %v27
  %203 = vmatprep.subr.mxu0 0.0
  %204 = vmatpush1.msra.mxu0 %v28
  %205 = vmatprep.subr.mxu0 0.0
  %206 = vmatpush1.msra.mxu0 %v29
  %207 = vmatprep.subr.mxu0 0.0
  %208 = vmatpush1.msra.mxu0 %v30
  %209 = vmatprep.subr.mxu0 0.0
  %210 = vmatpush1.msra.mxu0 %v31
  %211 = vmatprep.subr.mxu0 0.0
  %212 = vmatpush1.msra.mxu0 %v63
  %213 = vmatprep.subr.mxu0 0.0
  %214 = vmatpush1.msra.mxu0 0.0
  %215 = vmatprep.subr.mxu0 0.0
  %216 = vmatpush1.msra.mxu0 0.0
  %217 = vmatprep.subr.mxu0 0.0
  %218 = vmatpush1.msra.mxu0 0.0
  %219 = vmatprep.subr.mxu0 0.0
  %220 = vmatpush1.msra.mxu0 0.0
  %221 = vmatprep.subr.mxu0 0.0
  %222 = vmatpush1.msra.mxu0 0.0
  %223 = vmatprep.subr.mxu0 0.0
  %224 = vmatpush1.msra.mxu0 0.0
  %225 = vmatprep.subr.mxu0 0.0
  %226 = vmatpush1.msra.mxu0 0.0
  %227 = vmatprep.subr.mxu0 0.0
  %228 = vmatpush1.msra.mxu0 0.0
  %229 = vmatprep.subr.mxu0 0.0
  %230 = vmatpush1.msra.mxu0 0.0
  %231 = vmatprep.subr.mxu0 0.0
  %232 = vmatpush1.msra.mxu0 0.0
  %233 = vmatprep.subr.mxu0 0.0
  %234 = vmatpush1.msra.mxu0 0.0
  %235 = vmatprep.subr.mxu0 0.0
  %236 = vmatpush1.msra.mxu0 0.0
  %237 = vmatprep.subr.mxu0 0.0
  %238 = vmatpush1.msra.mxu0 0.0
  %239 = vmatprep.mubr.f32.mxu0 %v164
  %240 = vmatmul.mubr.f32.gmra.mrb[0].mxu0 %v155
  %v241 = vpop.f32.mrb[0].mxu0
  %v242 = vadd.f32 %v46, %v241
  %v243 = vpop.f32.mrb[0].mxu0
  %244 = vmatprep.mubr.f32.mxu0 %v167
  %245 = vmatmul.mubr.f32.gmra.mrb[0].mxu0 %v157
  %v246 = vpop.f32.mrb[0].mxu0
  %v247 = vadd.f32 %v46, %v246
  %v248 = vpop.f32.mrb[0].mxu0
  %249 = vmatprep.mubr.f32.mxu0 %v170
  %250 = vmatmul.mubr.f32.gmra.mrb[0].mxu0 %v159
  %v251 = vpop.f32.mrb[0].mxu0
  %v252 = vadd.f32 %v46, %v251
  %v253 = vpop.f32.mrb[0].mxu0
  %254 = vmatprep.mubr.f32.mxu0 %v173
  %255 = vmatmul.mubr.f32.gmra.mrb[0].mxu0 %v161
  %v256 = vpop.f32.mrb[0].mxu0
  %v257 = vadd.f32 %v46, %v256
  %v258 = vpop.f32.mrb[0].mxu0
  %259 = vdwg.mxu0
  %v260 = vtanh.pop %v242
  %v261 = vtanh.pop %v247
  %v262 = vtanh.pop %v252
  %v263 = vtanh.pop %v257
  %s264 = scalar_lea.vmem %s0, 128
  %v265 = vld [vmem:[%s264] sm:$0xff]
  %v266 = vld [vmem:[%s264 + $0x8] sm:$0xff]
  %v267 = vld [vmem:[%s264 + $0x10] sm:$0xff]
  %v268 = vld [vmem:[%s264 + $0x18] sm:$0xff]
  %v269 = vld [vmem:[%s264 + $0x20] sm:$0xff]
  %v270 = vld [vmem:[%s264 + $0x28] sm:$0xff]
  %v271 = vld [vmem:[%s264 + $0x30] sm:$0xff]
  %v272 = vld [vmem:[%s264 + $0x38] sm:$0xff]
  %v274 = vsel %vm48, %v266, 0
  %v277 = vsel %vm48, %v268, 0
  %v280 = vsel %vm48, %v270, 0
  %v283 = vsel %vm48, %v272, 0
  %285 = vmatprep.subr.mxu0 0.0
  %286 = vmatpush1.msra.mxu0 %v14
  %287 = vmatprep.subr.mxu0 0.0
  %288 = vmatpush1.msra.mxu0 %v15
  %289 = vmatprep.subr.mxu0 0.0
  %290 = vmatpush1.msra.mxu0 %v16
  %291 = vmatprep.subr.mxu0 0.0
  %292 = vmatpush1.msra.mxu0 %v17
  %293 = vmatprep.subr.mxu0 0.0
  %294 = vmatpush1.msra.mxu0 %v18
  %295 = vmatprep.subr.mxu0 0.0
  %296 = vmatpush1.msra.mxu0 %v19
  %297 = vmatprep.subr.mxu0 0.0
  %298 = vmatpush1.msra.mxu0 %v20
  %299 = vmatprep.subr.mxu0 0.0
  %300 = vmatpush1.msra.mxu0 %v21
  %301 = vmatprep.subr.mxu0 0.0
  %302 = vmatpush1.msra.mxu0 %v22
  %303 = vmatprep.subr.mxu0 0.0
  %304 = vmatpush1.msra.mxu0 %v23
  %305 = vmatprep.subr.mxu0 0.0
  %306 = vmatpush1.msra.mxu0 %v24
  %307 = vmatprep.subr.mxu0 0.0
  %308 = vmatpush1.msra.mxu0 %v25
  %309 = vmatprep.subr.mxu0 0.0
  %310 = vmatpush1.msra.mxu0 %v26
  %311 = vmatprep.subr.mxu0 0.0
  %312 = vmatpush1.msra.mxu0 %v27
  %313 = vmatprep.subr.mxu0 0.0
  %314 = vmatpush1.msra.mxu0 %v28
  %315 = vmatprep.subr.mxu0 0.0
  %316 = vmatpush1.msra.mxu0 %v29
  %317 = vmatprep.subr.mxu0 0.0
  %318 = vmatpush1.msra.mxu0 %v30
  %319 = vmatprep.subr.mxu0 0.0
  %320 = vmatpush1.msra.mxu0 %v31
  %321 = vmatprep.subr.mxu0 0.0
  %322 = vmatpush1.msra.mxu0 %v63
  %323 = vmatprep.subr.mxu0 0.0
  %324 = vmatpush1.msra.mxu0 0.0
  %325 = vmatprep.subr.mxu0 0.0
  %326 = vmatpush1.msra.mxu0 0.0
  %327 = vmatprep.subr.mxu0 0.0
  %328 = vmatpush1.msra.mxu0 0.0
  %329 = vmatprep.subr.mxu0 0.0
  %330 = vmatpush1.msra.mxu0 0.0
  %331 = vmatprep.subr.mxu0 0.0
  %332 = vmatpush1.msra.mxu0 0.0
  %333 = vmatprep.subr.mxu0 0.0
  %334 = vmatpush1.msra.mxu0 0.0
  %335 = vmatprep.subr.mxu0 0.0
  %336 = vmatpush1.msra.mxu0 0.0
  %337 = vmatprep.subr.mxu0 0.0
  %338 = vmatpush1.msra.mxu0 0.0
  %339 = vmatprep.subr.mxu0 0.0
  %340 = vmatpush1.msra.mxu0 0.0
  %341 = vmatprep.subr.mxu0 0.0
  %342 = vmatpush1.msra.mxu0 0.0
  %343 = vmatprep.subr.mxu0 0.0
  %344 = vmatpush1.msra.mxu0 0.0
  %345 = vmatprep.subr.mxu0 0.0
  %346 = vmatpush1.msra.mxu0 0.0
  %347 = vmatprep.subr.mxu0 0.0
  %348 = vmatpush1.msra.mxu0 0.0
  %349 = vmatprep.mubr.f32.mxu0 %v274
  %350 = vmatmul.mubr.f32.gmra.mrb[0].mxu0 %v265
  %v351 = vpop.f32.mrb[0].mxu0
  %v352 = vadd.f32 %v46, %v351
  %v353 = vpop.f32.mrb[0].mxu0
  %354 = vmatprep.mubr.f32.mxu0 %v277
  %355 = vmatmul.mubr.f32.gmra.mrb[0].mxu0 %v267
  %v356 = vpop.f32.mrb[0].mxu0
  %v357 = vadd.f32 %v46, %v356
  %v358 = vpop.f32.mrb[0].mxu0
  %359 = vmatprep.mubr.f32.mxu0 %v280
  %360 = vmatmul.mubr.f32.gmra.mrb[0].mxu0 %v269
  %v361 = vpop.f32.mrb[0].mxu0
  %v362 = vadd.f32 %v46, %v361
  %v363 = vpop.f32.mrb[0].mxu0
  %364 = vmatprep.mubr.f32.mxu0 %v283
  %365 = vmatmul.mubr.f32.gmra.mrb[0].mxu0 %v271
  %v366 = vpop.f32.mrb[0].mxu0
  %v367 = vadd.f32 %v46, %v366
  %v368 = vpop.f32.mrb[0].mxu0
  %369 = vdwg.mxu0
  %v370 = vtanh.pop %v352
  %v371 = vtanh.pop %v357
  %v372 = vtanh.pop %v362
  %v373 = vtanh.pop %v367
  %s374 = scalar_lea.vmem %s0, 192
  %v375 = vld [vmem:[%s374] sm:$0xff]
  %v376 = vld [vmem:[%s374 + $0x8] sm:$0xff]
  %v377 = vld [vmem:[%s374 + $0x10] sm:$0xff]
  %v378 = vld [vmem:[%s374 + $0x18] sm:$0xff]
  %v379 = vld [vmem:[%s374 + $0x20] sm:$0xff]
  %v380 = vld [vmem:[%s374 + $0x28] sm:$0xff]
  %v381 = vld [vmem:[%s374 + $0x30] sm:$0xff]
  %v382 = vld [vmem:[%s374 + $0x38] sm:$0xff]
  %v384 = vsel %vm48, %v376, 0
  %v387 = vsel %vm48, %v378, 0
  %v390 = vsel %vm48, %v380, 0
  %v393 = vsel %vm48, %v382, 0
  %395 = vmatprep.subr.mxu0 0.0
  %396 = vmatpush1.msra.mxu0 %v14
  %397 = vmatprep.subr.mxu0 0.0
  %398 = vmatpush1.msra.mxu0 %v15
  %399 = vmatprep.subr.mxu0 0.0
  %400 = vmatpush1.msra.mxu0 %v16
  %401 = vmatprep.subr.mxu0 0.0
  %402 = vmatpush1.msra.mxu0 %v17
  %403 = vmatprep.subr.mxu0 0.0
  %404 = vmatpush1.msra.mxu0 %v18
  %405 = vmatprep.subr.mxu0 0.0
  %406 = vmatpush1.msra.mxu0 %v19
  %407 = vmatprep.subr.mxu0 0.0
  %408 = vmatpush1.msra.mxu0 %v20
  %409 = vmatprep.subr.mxu0 0.0
  %410 = vmatpush1.msra.mxu0 %v21
  %411 = vmatprep.subr.mxu0 0.0
  %412 = vmatpush1.msra.mxu0 %v22
  %413 = vmatprep.subr.mxu0 0.0
  %414 = vmatpush1.msra.mxu0 %v23
  %415 = vmatprep.subr.mxu0 0.0
  %416 = vmatpush1.msra.mxu0 %v24
  %417 = vmatprep.subr.mxu0 0.0
  %418 = vmatpush1.msra.mxu0 %v25
  %419 = vmatprep.subr.mxu0 0.0
  %420 = vmatpush1.msra.mxu0 %v26
  %421 = vmatprep.subr.mxu0 0.0
  %422 = vmatpush1.msra.mxu0 %v27
  %423 = vmatprep.subr.mxu0 0.0
  %424 = vmatpush1.msra.mxu0 %v28
  %425 = vmatprep.subr.mxu0 0.0
  %426 = vmatpush1.msra.mxu0 %v29
  %427 = vmatprep.subr.mxu0 0.0
  %428 = vmatpush1.msra.mxu0 %v30
  %429 = vmatprep.subr.mxu0 0.0
  %430 = vmatpush1.msra.mxu0 %v31
  %431 = vmatprep.subr.mxu0 0.0
  %432 = vmatpush1.msra.mxu0 %v63
  %433 = vmatprep.subr.mxu0 0.0
  %434 = vmatpush1.msra.mxu0 0.0
  %435 = vmatprep.subr.mxu0 0.0
  %436 = vmatpush1.msra.mxu0 0.0
  %437 = vmatprep.subr.mxu0 0.0
  %438 = vmatpush1.msra.mxu0 0.0
  %439 = vmatprep.subr.mxu0 0.0
  %440 = vmatpush1.msra.mxu0 0.0
  %441 = vmatprep.subr.mxu0 0.0
  %442 = vmatpush1.msra.mxu0 0.0
  %443 = vmatprep.subr.mxu0 0.0
  %444 = vmatpush1.msra.mxu0 0.0
  %445 = vmatprep.subr.mxu0 0.0
  %446 = vmatpush1.msra.mxu0 0.0
  %447 = vmatprep.subr.mxu0 0.0
  %448 = vmatpush1.msra.mxu0 0.0
  %449 = vmatprep.subr.mxu0 0.0
  %450 = vmatpush1.msra.mxu0 0.0
  %451 = vmatprep.subr.mxu0 0.0
  %452 = vmatpush1.msra.mxu0 0.0
  %453 = vmatprep.subr.mxu0 0.0
  %454 = vmatpush1.msra.mxu0 0.0
  %455 = vmatprep.subr.mxu0 0.0
  %456 = vmatpush1.msra.mxu0 0.0
  %457 = vmatprep.subr.mxu0 0.0
  %458 = vmatpush1.msra.mxu0 0.0
  %459 = vmatprep.mubr.f32.mxu0 %v384
  %460 = vmatmul.mubr.f32.gmra.mrb[0].mxu0 %v375
  %v461 = vpop.f32.mrb[0].mxu0
  %v462 = vadd.f32 %v46, %v461
  %v463 = vpop.f32.mrb[0].mxu0
  %464 = vmatprep.mubr.f32.mxu0 %v387
  %465 = vmatmul.mubr.f32.gmra.mrb[0].mxu0 %v377
  %v466 = vpop.f32.mrb[0].mxu0
  %v467 = vadd.f32 %v46, %v466
  %v468 = vpop.f32.mrb[0].mxu0
  %469 = vmatprep.mubr.f32.mxu0 %v390
  %470 = vmatmul.mubr.f32.gmra.mrb[0].mxu0 %v379
  %v471 = vpop.f32.mrb[0].mxu0
  %v472 = vadd.f32 %v46, %v471
  %v473 = vpop.f32.mrb[0].mxu0
  %474 = vmatprep.mubr.f32.mxu0 %v393
  %475 = vmatmul.mubr.f32.gmra.mrb[0].mxu0 %v381
  %v476 = vpop.f32.mrb[0].mxu0
  %v477 = vadd.f32 %v46, %v476
  %v478 = vpop.f32.mrb[0].mxu0
  %479 = vdwg.mxu0
  %v480 = vtanh.pop %v462
  %v481 = vtanh.pop %v467
  %v482 = vtanh.pop %v472
  %v483 = vtanh.pop %v477
  %v484 = vadd.f32 %v150, %v260
  %v485 = vadd.f32 %v151, %v261
  %v486 = vadd.f32 %v152, %v262
  %v487 = vadd.f32 %v153, %v263
  %v488 = vadd.f32 %v484, %v370
  %v489 = vadd.f32 %v485, %v371
  %v490 = vadd.f32 %v486, %v372
  %v491 = vadd.f32 %v487, %v373
  %v492 = vadd.f32 %v488, %v480
  %v493 = vadd.f32 %v489, %v481
  %v494 = vadd.f32 %v490, %v482
  %v495 = vadd.f32 %v491, %v483
  %v496 = vmul.f32 %v492, 0.25
  %v497 = vmul.f32 %v493, 0.25
  %v498 = vmul.f32 %v494, 0.25
  %v499 = vmul.f32 %v495, 0.25
  %500 = vst [vmem:[%s3] sm:$0xff] %v496
  %501 = vst [vmem:[%s3 + $0x8] sm:$0xff] %v497
  %502 = vst [vmem:[%s3 + $0x10] sm:$0xff] %v498
  %503 = vst [vmem:[%s3 + $0x18] sm:$0xff] %v499
  // Predicated region
  $region14: #{lenet_forward.4} parent=0 // pred_check
    _
  $region15: #{lenet_forward.4} parent=0 // pred_check_branch
    %505 = sbr.rel (0) target = $region17
  $region16: #{lenet_forward.4} parent=0 // pred_region
    _
  $region17: #{lenet_forward.4} parent=0 // pred_fallthru
    _
  // Predicated region
  $region18: #{lenet_forward.4} parent=0 // pred_check
    _
  $region19: #{lenet_forward.4} parent=0 // pred_check_branch
    %507 = sbr.rel (0) target = $region21
  $region20: #{lenet_forward.4} parent=0 // pred_region
    _
  $region21: #{lenet_forward.4} parent=0 // pred_fallthru
    _

// kernel: lenet_forward.5
$region0: #{lenet_forward.5}
  #allocation0 [shape = 'u32[]', space=smem, size = 0x4, offset = 0x4, fixed_abs, tag = 'smem constant byte address 0x4 - core index']
  #allocation1 [shape = 'u32[144,128]{1,0:T(1,128)}', space=vmem, size = 0x12000, scoped, tag = 'internal scratch']
  %s0 = inlined_call_operand.vmem [shape: f32[8,256], index: 0, kind: input, shape index: {}]
  %s1 = inlined_call_operand.vmem [shape: f32[256,128], index: 1, kind: input, shape index: {}]
  %s2 = inlined_call_operand.vmem [shape: f32[1,128], index: 2, kind: input, shape index: {}]
  %s3 = inlined_call_operand.vmem [shape: f32[128,128], index: 3, kind: input, shape index: {}]
  %s4 = inlined_call_operand.vmem [shape: f32[1,128], index: 4, kind: input, shape index: {}]
  %s5 = inlined_call_operand.vmem [shape: f32[8,128], index: 5, kind: output, shape index: {}]
  %s6 = sld [smem:[#allocation0]]
  $region30: #{lenet_forward.5} parent=0
    _
  %s8 = ssub.s32 1, %s6
  %s9 = scalar_select 0, %s8, %s6
  // Predicated region
  $region2: #{lenet_forward.5} parent=0 // pred_check
    _
  $region3: #{lenet_forward.5} parent=0 // pred_check_branch
    %11 = sbr.rel (0) target = $region5
  $region4: #{lenet_forward.5} parent=0 // pred_region
    _
  $region5: #{lenet_forward.5} parent=0 // pred_fallthru
    _
  // Predicated region
  $region6: #{lenet_forward.5} parent=0 // pred_check
    _
  $region7: #{lenet_forward.5} parent=0 // pred_check_branch
    %13 = sbr.rel (0) target = $region9
  $region8: #{lenet_forward.5} parent=0 // pred_region
    _
  $region9: #{lenet_forward.5} parent=0 // pred_fallthru
    _
  // Predicated region
  $region10: #{lenet_forward.5} parent=0 // pred_check
    _
  $region11: #{lenet_forward.5} parent=0 // pred_check_branch
    %15 = sbr.rel (0) target = $region13
  $region12: #{lenet_forward.5} parent=0 // pred_region
    _
  $region13: #{lenet_forward.5} parent=0 // pred_fallthru
    _
  // Predicated region
  $region14: #{lenet_forward.5} parent=0 // pred_check
    _
  $region15: #{lenet_forward.5} parent=0 // pred_check_branch
    %17 = sbr.rel (0) target = $region17
  $region16: #{lenet_forward.5} parent=0 // pred_region
    _
  $region17: #{lenet_forward.5} parent=0 // pred_fallthru
    _
  // Predicated region
  $region18: #{lenet_forward.5} parent=0 // pred_check
    _
  $region19: #{lenet_forward.5} parent=0 // pred_check_branch
    %19 = sbr.rel (0) target = $region21
  $region20: #{lenet_forward.5} parent=0 // pred_region
    _
  $region21: #{lenet_forward.5} parent=0 // pred_fallthru
    _
  %v20 = vld [vmem:[%s0] sm:$0xff]
  %v21 = vld [vmem:[%s0 + $0x8] sm:$0xff]
  %v22 = vld [vmem:[%s1] sm:$0xff]
  %v23 = vld [vmem:[%s1 + $0x8] sm:$0xff]
  %v24 = vld [vmem:[%s1 + $0x10] sm:$0xff]
  %v25 = vld [vmem:[%s1 + $0x18] sm:$0xff]
  %v26 = vld [vmem:[%s1 + $0x20] sm:$0xff]
  %v27 = vld [vmem:[%s1 + $0x28] sm:$0xff]
  %v28 = vld [vmem:[%s1 + $0x30] sm:$0xff]
  %v29 = vld [vmem:[%s1 + $0x38] sm:$0xff]
  %v30 = vld [vmem:[%s1 + $0x40] sm:$0xff]
  %v31 = vld [vmem:[%s1 + $0x48] sm:$0xff]
  %v32 = vld [vmem:[%s1 + $0x50] sm:$0xff]
  %v33 = vld [vmem:[%s1 + $0x58] sm:$0xff]
  %v34 = vld [vmem:[%s1 + $0x60] sm:$0xff]
  %v35 = vld [vmem:[%s1 + $0x68] sm:$0xff]
  %v36 = vld [vmem:[%s1 + $0x70] sm:$0xff]
  %v37 = vld [vmem:[%s1 + $0x78] sm:$0xff]
  %v38 = vld [vmem:[%s1 + $0x80] sm:$0xff]
  %v39 = vld [vmem:[%s1 + $0x88] sm:$0xff]
  %v40 = vld [vmem:[%s1 + $0x90] sm:$0xff]
  %v41 = vld [vmem:[%s1 + $0x98] sm:$0xff]
  %v42 = vld [vmem:[%s1 + $0xa0] sm:$0xff]
  %v43 = vld [vmem:[%s1 + $0xa8] sm:$0xff]
  %v44 = vld [vmem:[%s1 + $0xb0] sm:$0xff]
  %v45 = vld [vmem:[%s1 + $0xb8] sm:$0xff]
  %v46 = vld [vmem:[%s1 + $0xc0] sm:$0xff]
  %v47 = vld [vmem:[%s1 + $0xc8] sm:$0xff]
  %v48 = vld [vmem:[%s1 + $0xd0] sm:$0xff]
  %v49 = vld [vmem:[%s1 + $0xd8] sm:$0xff]
  %v50 = vld [vmem:[%s1 + $0xe0] sm:$0xff]
  %v51 = vld [vmem:[%s1 + $0xe8] sm:$0xff]
  %v52 = vld [vmem:[%s1 + $0xf0] sm:$0xff]
  %v53 = vld [vmem:[%s1 + $0xf8] sm:$0xff]
  %v54 = vld [vmem:[%s2] sm:$0x1]
  %v56 = vlaneseq
  %v57 = vshrl.u32 %v56, 7
  %v58 = vsub.s32 0, %v57
  %v59 = vrot.slane %v54, %v58
  %61 = vmatprep.subr.mxu0 0.0
  %62 = vmatpush1.msra.mxu0 %v22
  %63 = vmatprep.subr.mxu0 0.0
  %64 = vmatpush1.msra.mxu0 %v23
  %65 = vmatprep.subr.mxu0 0.0
  %66 = vmatpush1.msra.mxu0 %v24
  %67 = vmatprep.subr.mxu0 0.0
  %68 = vmatpush1.msra.mxu0 %v25
  %69 = vmatprep.subr.mxu0 0.0
  %70 = vmatpush1.msra.mxu0 %v26
  %71 = vmatprep.subr.mxu0 0.0
  %72 = vmatpush1.msra.mxu0 %v27
  %73 = vmatprep.subr.mxu0 0.0
  %74 = vmatpush1.msra.mxu0 %v28
  %75 = vmatprep.subr.mxu0 0.0
  %76 = vmatpush1.msra.mxu0 %v29
  %77 = vmatprep.subr.mxu0 0.0
  %78 = vmatpush1.msra.mxu0 %v30
  %79 = vmatprep.subr.mxu0 0.0
  %80 = vmatpush1.msra.mxu0 %v31
  %81 = vmatprep.subr.mxu0 0.0
  %82 = vmatpush1.msra.mxu0 %v32
  %83 = vmatprep.subr.mxu0 0.0
  %84 = vmatpush1.msra.mxu0 %v33
  %85 = vmatprep.subr.mxu0 0.0
  %86 = vmatpush1.msra.mxu0 %v34
  %87 = vmatprep.subr.mxu0 0.0
  %88 = vmatpush1.msra.mxu0 %v35
  %89 = vmatprep.subr.mxu0 0.0
  %90 = vmatpush1.msra.mxu0 %v36
  %91 = vmatprep.subr.mxu0 0.0
  %92 = vmatpush1.msra.mxu0 %v37
  %93 = vmatprep.subr.mxu0 0.0
  %94 = vmatpush1.msra.mxu0 %v38
  %95 = vmatprep.subr.mxu0 0.0
  %96 = vmatpush1.msra.mxu0 %v39
  %97 = vmatprep.subr.mxu0 0.0
  %98 = vmatpush1.msra.mxu0 %v40
  %99 = vmatprep.subr.mxu0 0.0
  %100 = vmatpush1.msra.mxu0 %v41
  %101 = vmatprep.subr.mxu0 0.0
  %102 = vmatpush1.msra.mxu0 %v42
  %103 = vmatprep.subr.mxu0 0.0
  %104 = vmatpush1.msra.mxu0 %v43
  %105 = vmatprep.subr.mxu0 0.0
  %106 = vmatpush1.msra.mxu0 %v44
  %107 = vmatprep.subr.mxu0 0.0
  %108 = vmatpush1.msra.mxu0 %v45
  %109 = vmatprep.subr.mxu0 0.0
  %110 = vmatpush1.msra.mxu0 %v46
  %111 = vmatprep.subr.mxu0 0.0
  %112 = vmatpush1.msra.mxu0 %v47
  %113 = vmatprep.subr.mxu0 0.0
  %114 = vmatpush1.msra.mxu0 %v48
  %115 = vmatprep.subr.mxu0 0.0
  %116 = vmatpush1.msra.mxu0 %v49
  %117 = vmatprep.subr.mxu0 0.0
  %118 = vmatpush1.msra.mxu0 %v50
  %119 = vmatprep.subr.mxu0 0.0
  %120 = vmatpush1.msra.mxu0 %v51
  %121 = vmatprep.subr.mxu0 0.0
  %122 = vmatpush1.msra.mxu0 %v52
  %123 = vmatprep.subr.mxu0 0.0
  %124 = vmatpush1.msra.mxu0 %v53
  %125 = vmatprep.mubr.f32.mxu0 %v21
  %126 = vmatmul.mubr.f32.gmra.mrb[0].mxu0 %v20
  %v127 = vpop.f32.mrb[0].mxu0
  %v128 = vadd.f32 %v59, %v127
  %v129 = vpop.f32.mrb[0].mxu0
  %130 = vdwg.mxu0
  %v131 = vtanh.pop %v128
  %v132 = vld [vmem:[%s3] sm:$0xff]
  %v133 = vld [vmem:[%s3 + $0x8] sm:$0xff]
  %v134 = vld [vmem:[%s3 + $0x10] sm:$0xff]
  %v135 = vld [vmem:[%s3 + $0x18] sm:$0xff]
  %v136 = vld [vmem:[%s3 + $0x20] sm:$0xff]
  %v137 = vld [vmem:[%s3 + $0x28] sm:$0xff]
  %v138 = vld [vmem:[%s3 + $0x30] sm:$0xff]
  %v139 = vld [vmem:[%s3 + $0x38] sm:$0xff]
  %v140 = vld [vmem:[%s3 + $0x40] sm:$0xff]
  %v141 = vld [vmem:[%s3 + $0x48] sm:$0xff]
  %v142 = vld [vmem:[%s3 + $0x50] sm:$0xff]
  %v143 = vld [vmem:[%s3 + $0x58] sm:$0xff]
  %v144 = vld [vmem:[%s3 + $0x60] sm:$0xff]
  %v145 = vld [vmem:[%s3 + $0x68] sm:$0xff]
  %v146 = vld [vmem:[%s3 + $0x70] sm:$0xff]
  %v147 = vld [vmem:[%s3 + $0x78] sm:$0xff]
  %v148 = vld [vmem:[%s4] sm:$0x1]
  %v150 = vlaneseq
  %v151 = vshrl.u32 %v150, 7
  %v152 = vsub.s32 0, %v151
  %v153 = vrot.slane %v148, %v152
  %155 = vmatprep.subr.mxu0 0.0
  %156 = vmatpush1.msra.mxu0 %v132
  %157 = vmatprep.subr.mxu0 0.0
  %158 = vmatpush1.msra.mxu0 %v133
  %159 = vmatprep.subr.mxu0 0.0
  %160 = vmatpush1.msra.mxu0 %v134
  %161 = vmatprep.subr.mxu0 0.0
  %162 = vmatpush1.msra.mxu0 %v135
  %163 = vmatprep.subr.mxu0 0.0
  %164 = vmatpush1.msra.mxu0 %v136
  %165 = vmatprep.subr.mxu0 0.0
  %166 = vmatpush1.msra.mxu0 %v137
  %167 = vmatprep.subr.mxu0 0.0
  %168 = vmatpush1.msra.mxu0 %v138
  %169 = vmatprep.subr.mxu0 0.0
  %170 = vmatpush1.msra.mxu0 %v139
  %171 = vmatprep.subr.mxu0 0.0
  %172 = vmatpush1.msra.mxu0 %v140
  %173 = vmatprep.subr.mxu0 0.0
  %174 = vmatpush1.msra.mxu0 %v141
  %175 = vmatprep.subr.mxu0 0.0
  %176 = vmatpush1.msra.mxu0 %v142
  %177 = vmatprep.subr.mxu0 0.0
  %178 = vmatpush1.msra.mxu0 %v143
  %179 = vmatprep.subr.mxu0 0.0
  %180 = vmatpush1.msra.mxu0 %v144
  %181 = vmatprep.subr.mxu0 0.0
  %182 = vmatpush1.msra.mxu0 %v145
  %183 = vmatprep.subr.mxu0 0.0
  %184 = vmatpush1.msra.mxu0 %v146
  %185 = vmatprep.subr.mxu0 0.0
  %186 = vmatpush1.msra.mxu0 %v147
  %187 = vmatprep.subr.mxu0 0.0
  %188 = vmatpush1.msra.mxu0 0.0
  %189 = vmatprep.subr.mxu0 0.0
  %190 = vmatpush1.msra.mxu0 0.0
  %191 = vmatprep.subr.mxu0 0.0
  %192 = vmatpush1.msra.mxu0 0.0
  %193 = vmatprep.subr.mxu0 0.0
  %194 = vmatpush1.msra.mxu0 0.0
  %195 = vmatprep.subr.mxu0 0.0
  %196 = vmatpush1.msra.mxu0 0.0
  %197 = vmatprep.subr.mxu0 0.0
  %198 = vmatpush1.msra.mxu0 0.0
  %199 = vmatprep.subr.mxu0 0.0
  %200 = vmatpush1.msra.mxu0 0.0
  %201 = vmatprep.subr.mxu0 0.0
  %202 = vmatpush1.msra.mxu0 0.0
  %203 = vmatprep.subr.mxu0 0.0
  %204 = vmatpush1.msra.mxu0 0.0
  %205 = vmatprep.subr.mxu0 0.0
  %206 = vmatpush1.msra.mxu0 0.0
  %207 = vmatprep.subr.mxu0 0.0
  %208 = vmatpush1.msra.mxu0 0.0
  %209 = vmatprep.subr.mxu0 0.0
  %210 = vmatpush1.msra.mxu0 0.0
  %211 = vmatprep.subr.mxu0 0.0
  %212 = vmatpush1.msra.mxu0 0.0
  %213 = vmatprep.subr.mxu0 0.0
  %214 = vmatpush1.msra.mxu0 0.0
  %215 = vmatprep.subr.mxu0 0.0
  %216 = vmatpush1.msra.mxu0 0.0
  %217 = vmatprep.subr.mxu0 0.0
  %218 = vmatpush1.msra.mxu0 0.0
  %219 = vmatprep.mubr.f32.mxu0 0.0
  %220 = vmatmul.mubr.f32.gmra.mrb[0].mxu0 %v131
  %v221 = vpop.f32.mrb[0].mxu0
  %v222 = vadd.f32 %v153, %v221
  %v223 = vpop.f32.mrb[0].mxu0
  %224 = vdwg.mxu0
  %225 = vst [vmem:[%s5] sm:$0xff] %v222
  // Predicated region
  $region22: #{lenet_forward.5} parent=0 // pred_check
    _
  $region23: #{lenet_forward.5} parent=0 // pred_check_branch
    %227 = sbr.rel (0) target = $region25
  $region24: #{lenet_forward.5} parent=0 // pred_region
    _
  $region25: #{lenet_forward.5} parent=0 // pred_fallthru
    _
  // Predicated region
  $region26: #{lenet_forward.5} parent=0 // pred_check
    _
  $region27: #{lenet_forward.5} parent=0 // pred_check_branch
    %229 = sbr.rel (0) target = $region29
  $region28: #{lenet_forward.5} parent=0 // pred_region
    _
  $region29: #{lenet_forward.5} parent=0 // pred_fallthru
    _

</llo_original>
